<compile_context>
chip_gen: v6e
topology: v6e:2x2x1
jax: 0.10.0
libtpu: 0.0.40
codegen_flags: <defaults>
</compile_context>

<pallas_src>
import math

import jax
import jax.numpy as jnp
from jax.experimental import pallas as pl
from jax.experimental.pallas import tpu as pltpu

LANES = 128
SUBLANES = 8
NODE_TILE = 256  # rows per node tile when the graph is large


def _round_up(x, m):
    return ((x + m - 1) // m) * m


# ------------------------------ fused kernel ------------------------------- #

def _make_fused_kernel(rnn_layers, hp):
    """Fused (all months x all layers) GRU stack + MLP decoder.

    Refs (per node tile):
      x_ref      : (N_t, P)        current month's features, bf16 (P = padded dim)
      h0_ref     : (L, N_t, P)     initial hidden states, f32
      wih_ref    : (L, P, 3P)      input->gates weights, bf16, gate g at cols [gP, gP+P)
      whh_ref    : (L, P, 3P)      hidden->gates weights, bf16
      bih_ref    : (L, 1, 3P)      input bias, f32
      bhh_ref    : (L, 1, 3P)      hidden bias, f32
      w1_ref     : (P, H2P)        decoder layer-1 weight, bf16
      b1_ref     : (1, H2P)        decoder layer-1 bias, f32
      w2_ref     : (1, H2P)        decoder layer-2 weight row, f32
      b2_ref     : (1, 1)          decoder layer-2 bias, f32
      h0_out_ref : (N_t, P)        first layer's hidden after month 0
      scores_ref : (N_t, 128)      decoder score broadcast over 128 lanes
      h_scratch  : (L, N_t, P)     VMEM-resident hidden state (persists across months)
    """

    def kernel(x_ref, h0_ref, wih_ref, whh_ref, bih_ref, bhh_ref,
               w1_ref, b1_ref, w2_ref, b2_ref,
               h0_out_ref, scores_ref, h_scratch):
        t = pl.program_id(1)  # month index (serial / "arbitrary" axis)

        @pl.when(t == 0)
        def _init():
            h_scratch[...] = h0_ref[...]

        layer_in_bf16 = x_ref[...]                  # (N_t, P) bf16
        for layer in range(rnn_layers):             # small static unroll
            h_prev = h_scratch[layer]               # (N_t, P) f32
            # MXU matmuls in bf16, f32 accumulate.
            gi = jnp.dot(layer_in_bf16, wih_ref[layer],
                         preferred_element_type=jnp.float32) + bih_ref[layer]
            gh = jnp.dot(h_prev.astype(jnp.bfloat16), whh_ref[layer],
                         preferred_element_type=jnp.float32) + bhh_ref[layer]
            # PyTorch GRU gate order [r | z | n]; every slice is 128-lane aligned.
            r = jax.nn.sigmoid(gi[:, 0:hp] + gh[:, 0:hp])
            z = jax.nn.sigmoid(gi[:, hp:2 * hp] + gh[:, hp:2 * hp])
            n = jnp.tanh(gi[:, 2 * hp:3 * hp] + r * gh[:, 2 * hp:3 * hp])
            h_new = (1.0 - z) * n + z * h_prev
            h_scratch[layer] = h_new
            layer_in_bf16 = h_new.astype(jnp.bfloat16)

        @pl.when(t == 0)
        def _save_h0():
            # get_hidden(hidden_states[0]) after the first month (detached outside).
            h0_out_ref[...] = h_scratch[0]

        @pl.when(t == pl.num_programs(1) - 1)
        def _decode():
            last_h = h_scratch[rnn_layers - 1]
            hid = jnp.dot(last_h.astype(jnp.bfloat16), w1_ref[...],
                          preferred_element_type=jnp.float32) + b1_ref[...]
            hid = jnp.maximum(hid, 0.0)
            # Output width is 1 -> VPU multiply + lane reduction instead of a
            # near-empty 1-column MXU matmul; write a lane-dense 128-wide slab.
            s = jnp.sum(hid * w2_ref[...], axis=-1, keepdims=True) + b2_ref[...]
            scores_ref[...] = jnp.broadcast_to(s, scores_ref.shape)

    return kernel


@jax.jit
def _fused_gru_decoder(x_all, h0_pad, w_ih, w_hh, b_ih, b_hh, w1, b1, w2_row, b2):
    T, n_pad, P = x_all.shape
    L = h0_pad.shape[0]
    H2P = w1.shape[-1]
    assert h0_pad.shape[-1] == P

    tile_n = min(n_pad, NODE_TILE)
    num_node_tiles = n_pad // tile_n

    res3 = lambda i, t: (0, 0, 0)
    res2 = lambda i, t: (0, 0)

    in_specs = [
        pl.BlockSpec((None, tile_n, P), lambda i, t: (t, i, 0)),   # x: month-tiled
        pl.BlockSpec((L, tile_n, P), lambda i, t: (0, i, 0)),      # h0: node-tiled
        pl.BlockSpec((L, P, 3 * P), res3),                         # W_ih (resident)
        pl.BlockSpec((L, P, 3 * P), res3),                         # W_hh (resident)
        pl.BlockSpec((L, 1, 3 * P), res3),                         # b_ih
        pl.BlockSpec((L, 1, 3 * P), res3),                         # b_hh
        pl.BlockSpec((P, H2P), res2),                              # dec W1
        pl.BlockSpec((1, H2P), res2),                              # dec b1
        pl.BlockSpec((1, H2P), res2),                              # dec W2 row
        pl.BlockSpec((1, 1), res2),                                # dec b2
    ]
    out_specs = [
        pl.BlockSpec((tile_n, P), lambda i, t: (i, 0)),            # h0 after month 0
        pl.BlockSpec((tile_n, LANES), lambda i, t: (i, 0)),        # score slab
    ]
    out_shape = (jax.ShapeDtypeStruct((n_pad, P), jnp.float32),
                 jax.ShapeDtypeStruct((n_pad, LANES), jnp.float32))

    flops = (T * num_node_tiles * L * 4 * tile_n * P * 3 * P          # GRU matmuls
             + num_node_tiles * (2 * tile_n * P * H2P + 2 * tile_n * H2P))  # decoder
    transcendentals = T * num_node_tiles * L * tile_n * 3 * P
    bytes_accessed = sum(int(a.size) * a.dtype.itemsize for a in
                         (x_all, h0_pad, w_ih, w_hh, b_ih, b_hh, w1, b1, w2_row, b2))
    bytes_accessed += (n_pad * P + n_pad * LANES) * 4
    cost = pl.CostEstimate(flops=int(flops),
                           transcendentals=int(transcendentals),
                           bytes_accessed=int(bytes_accessed))

    return pl.pallas_call(
        _make_fused_kernel(L, P),
        out_shape=out_shape,
        grid_spec=pltpu.PrefetchScalarGridSpec(
            num_scalar_prefetch=0,
            grid=(num_node_tiles, T),
            in_specs=in_specs,
            out_specs=out_specs,
            scratch_shapes=[pltpu.VMEM((L, tile_n, P), jnp.float32)]),
        compiler_params=pltpu.CompilerParams(
            dimension_semantics=("parallel", "arbitrary"),
            vmem_limit_bytes=32 * 1024 * 1024),
        cost_estimate=cost,
    )(x_all, h0_pad, w_ih, w_hh, b_ih, b_hh, w1, b1, w2_row, b2)


# --------------------------- parameter construction ------------------------ #

def init_params(key, rnn_input_dim, rnn_hidden_dim, rnn_layers):
    """PyTorch-equivalent (unpadded, f32) GRUCell stack + 2-layer MLP decoder."""
    H = rnn_hidden_dim
    H2 = max(H // 2, 1)
    params = {"rnn": [], "dec": {}}
    keys = jax.random.split(key, rnn_layers * 4 + 4)
    ki = 0
    for layer in range(rnn_layers):
        d_in = rnn_input_dim if layer == 0 else H
        s = 1.0 / math.sqrt(H)
        w_ih = jax.random.uniform(keys[ki], (3 * H, d_in), minval=-s, maxval=s); ki += 1
        w_hh = jax.random.uniform(keys[ki], (3 * H, H), minval=-s, maxval=s); ki += 1
        b_ih = jax.random.uniform(keys[ki], (3 * H,), minval=-s, maxval=s); ki += 1
        b_hh = jax.random.uniform(keys[ki], (3 * H,), minval=-s, maxval=s); ki += 1
        params["rnn"].append({"w_ih": w_ih.astype(jnp.float32),
                              "w_hh": w_hh.astype(jnp.float32),
                              "b_ih": b_ih.astype(jnp.float32),
                              "b_hh": b_hh.astype(jnp.float32)})
    s1 = 1.0 / math.sqrt(H)
    s2 = 1.0 / math.sqrt(H2)
    params["dec"] = {
        "w1": jax.random.uniform(keys[ki], (H2, H), minval=-s1, maxval=s1).astype(jnp.float32),
        "b1": jax.random.uniform(keys[ki + 1], (H2,), minval=-s1, maxval=s1).astype(jnp.float32),
        "w2": jax.random.uniform(keys[ki + 2], (1, H2), minval=-s2, maxval=s2).astype(jnp.float32),
        "b2": jax.random.uniform(keys[ki + 3], (1,), minval=-s2, maxval=s2).astype(jnp.float32),
    }
    return params


def pack_params(params, rnn_input_dim, rnn_hidden_dim, rnn_layers):
    """Pad to 128-lane-aligned per-gate layout and cast MXU operands to bf16."""
    H = rnn_hidden_dim
    H2 = max(H // 2, 1)
    P = _round_up(max(rnn_input_dim, H), LANES)      # shared padded feature/hidden dim
    H2P = _round_up(H2, LANES)
    L = rnn_layers

    w_ih = jnp.zeros((L, P, 3 * P), jnp.bfloat16)
    w_hh = jnp.zeros((L, P, 3 * P), jnp.bfloat16)
    b_ih = jnp.zeros((L, 1, 3 * P), jnp.float32)
    b_hh = jnp.zeros((L, 1, 3 * P), jnp.float32)
    for layer, lp in enumerate(params["rnn"]):
        d_in = rnn_input_dim if layer == 0 else H
        wih_t = lp["w_ih"].T  # (d_in, 3H), gate order [r|z|n]
        whh_t = lp["w_hh"].T  # (H,    3H)
        for g in range(3):    # each gate's columns at a 128-aligned offset
            w_ih = w_ih.at[layer, :d_in, g * P:g * P + H].set(
                wih_t[:, g * H:(g + 1) * H].astype(jnp.bfloat16))
            w_hh = w_hh.at[layer, :H, g * P:g * P + H].set(
                whh_t[:, g * H:(g + 1) * H].astype(jnp.bfloat16))
            b_ih = b_ih.at[layer, 0, g * P:g * P + H].set(lp["b_ih"][g * H:(g + 1) * H])
            b_hh = b_hh.at[layer, 0, g * P:g * P + H].set(lp["b_hh"][g * H:(g + 1) * H])

    d = params["dec"]
    w1 = jnp.zeros((P, H2P), jnp.bfloat16).at[:H, :H2].set(d["w1"].T.astype(jnp.bfloat16))
    b1 = jnp.zeros((1, H2P), jnp.float32).at[0, :H2].set(d["b1"])
    w2_row = jnp.zeros((1, H2P), jnp.float32).at[0, :H2].set(d["w2"][0])
    b2 = d["b2"].reshape(1, 1).astype(jnp.float32)

    return {"w_ih": w_ih, "w_hh": w_hh, "b_ih": b_ih, "b_hh": b_hh,
            "w1": w1, "b1": b1, "w2_row": w2_row, "b2": b2}


# ------------------------------ forward pass ------------------------------- #

def rnn_only_forward(month_list, data_dict, packed, *, n_nodes, rnn_input_dim,
                     rnn_hidden_dim, rnn_layers, h0=None, upsample=0):
    """Mirrors RNN_only.forward (upsample == 0 path)."""
    P = _round_up(max(rnn_input_dim, rnn_hidden_dim), LANES)
    n_pad = _round_up(max(n_nodes, SUBLANES), SUBLANES)
    if n_pad > NODE_TILE:
        n_pad = _round_up(n_pad, NODE_TILE)
    T = len(month_list)

    # Stack months into one (T, N_pad, P) bf16 array -> a single gridded
    # pallas_call instead of T x L separate launches, at half the x HBM traffic.
    xs = jnp.stack([jnp.asarray(data_dict[m][0], jnp.float32) for m in month_list], 0)
    x_all = (jnp.zeros((T, n_pad, P), jnp.float32)
             .at[:, :n_nodes, :rnn_input_dim].set(xs)).astype(jnp.bfloat16)

    h0_pad = jnp.zeros((rnn_layers, n_pad, P), jnp.float32)
    if h0 is not None:
        h0_pad = h0_pad.at[:, :n_nodes, :rnn_hidden_dim].set(
            jnp.stack([jnp.asarray(h, jnp.float32) for h in h0], 0))

    labs = jnp.asarray(data_dict[month_list[-1]][1])

    h0_out_pad, scores_slab = _fused_gru_decoder(
        x_all, h0_pad, packed["w_ih"], packed["w_hh"], packed["b_ih"], packed["b_hh"],
        packed["w1"], packed["b1"], packed["w2_row"], packed["b2"])

    scores = scores_slab[:n_nodes, 0:1]
    h0_out = [jax.lax.stop_gradient(h0_out_pad[:n_nodes, :rnn_hidden_dim])]
    # TODO(synk): upsample_embeddings (graph-based synthetic oversampling) has no
    # clean Pallas equivalent; only the upsample == 0 path is implemented.
    synth_index = []
    return scores, labs, h0_out, synth_index


# --------------------------- pure-JAX reference ----------------------------- #

def _reference_forward(month_list, data_dict, params, n_nodes, rnn_hidden_dim, rnn_layers):
    H = rnn_hidden_dim
    hs = [jnp.zeros((n_nodes, H), jnp.float32) for _ in range(rnn_layers)]
    h0_out = None
    for i, m in enumerate(month_list):
        layer_in = jnp.asarray(data_dict[m][0], jnp.float32)
        new = []
        for layer in range(rnn_layers):
            p = params["rnn"][layer]
            gi = layer_in @ p["w_ih"].T + p["b_ih"]
            gh = hs[layer] @ p["w_hh"].T + p["b_hh"]
            r = jax.nn.sigmoid(gi[:, :H] + gh[:, :H])
            z = jax.nn.sigmoid(gi[:, H:2 * H] + gh[:, H:2 * H])
            n = jnp.tanh(gi[:, 2 * H:] + r * gh[:, 2 * H:])
            h = (1.0 - z) * n + z * hs[layer]
            new.append(h)
            layer_in = h
        hs = new
        if i == 0:
            h0_out = hs[0]
    d = params["dec"]
    hid = jnp.maximum(hs[-1] @ d["w1"].T + d["b1"], 0.0)
    scores = hid @ d["w2"].T + d["b2"]
    return scores, h0_out


# ---------------------------------- main ----------------------------------- #

if __name__ == "__main__":
    n_nodes = 8
    rnn_input_dim = 16
    rnn_hidden_dim = 32
    rnn_layers = 2
    n_months = 4

    key = jax.random.PRNGKey(0)
    pkey, dkey = jax.random.split(key)
    params = init_params(pkey, rnn_input_dim, rnn_hidden_dim, rnn_layers)
    packed = pack_params(params, rnn_input_dim, rnn_hidden_dim, rnn_layers)

    month_list = [f"month_{i}" for i in range(n_months)]
    data_dict = {}
    dkeys = jax.random.split(dkey, n_months * 2)
    for i, m in enumerate(month_list):
        x = jax.random.normal(dkeys[2 * i], (n_nodes, rnn_input_dim), jnp.float32)
        y = jax.random.bernoulli(dkeys[2 * i + 1], 0.3, (n_nodes,)).astype(jnp.float32)
        data_dict[m] = (x, y)

    scores, labs, h0, synth_index = rnn_only_forward(
        month_list, data_dict, packed, n_nodes=n_nodes,
        rnn_input_dim=rnn_input_dim, rnn_hidden_dim=rnn_hidden_dim,
        rnn_layers=rnn_layers, h0=None, upsample=0)

    jax.block_until_ready(scores)
    jax.block_until_ready(labs)
    jax.block_until_ready(h0[0])

    # Shape / contract checks (mirror the PyTorch forward's return structure).
    assert scores.shape == (n_nodes, 1)
    assert labs.shape == (n_nodes,)
    assert len(h0) == 1 and h0[0].shape == (n_nodes, rnn_hidden_dim)
    assert synth_index == []
    assert bool(jnp.all(jnp.isfinite(scores)))

    # Numerical check vs pure-JAX f32 reference (bf16 MXU operands -> loose tol).
    ref_scores, ref_h0 = _reference_forward(
        month_list, data_dict, params, n_nodes, rnn_hidden_dim, rnn_layers)
    assert float(jnp.max(jnp.abs(scores - ref_scores))) < 0.1
    assert float(jnp.max(jnp.abs(h0[0] - ref_h0))) < 0.1

    print("KERNEL_OK")
</pallas_src>

<mosaic_0001>
module attributes {stable_mosaic.version = 11 : i64} {
  func.func @kernel(%arg0: i32, %arg1: i32, %arg2: memref<1x8x128xbf16, #tpu.memory_space<vmem>>, %arg3: memref<2x8x128xf32, #tpu.memory_space<vmem>>, %arg4: memref<2x128x384xbf16, #tpu.memory_space<vmem>>, %arg5: memref<2x128x384xbf16, #tpu.memory_space<vmem>>, %arg6: memref<2x1x384xf32, #tpu.memory_space<vmem>>, %arg7: memref<2x1x384xf32, #tpu.memory_space<vmem>>, %arg8: memref<128x128xbf16, #tpu.memory_space<vmem>>, %arg9: memref<1x128xf32, #tpu.memory_space<vmem>>, %arg10: memref<1x128xf32, #tpu.memory_space<vmem>>, %arg11: memref<1x1xf32, #tpu.memory_space<vmem>>, %arg12: memref<8x128xf32, #tpu.memory_space<vmem>>, %arg13: memref<8x128xf32, #tpu.memory_space<vmem>>, %arg14: memref<2x8x128xf32, #tpu.memory_space<vmem>>) attributes {dimension_semantics = [#tpu.dimension_semantics<parallel>, #tpu.dimension_semantics<arbitrary>], iteration_bounds = array<i64: 1, 4>, scalar_prefetch = 0 : i64, scratch_operands = 1 : i64, tpu.core_type = #tpu.core_type<tc>, window_params = [{transform_indices = @transform_0, window_bounds = array<i64: 1, 8, 128>}, {transform_indices = @transform_1, window_bounds = array<i64: 2, 8, 128>}, {pipeline_mode = #tpu.pipeline_mode<synchronous>, transform_indices = @transform_2, window_bounds = array<i64: 2, 128, 384>}, {pipeline_mode = #tpu.pipeline_mode<synchronous>, transform_indices = @transform_3, window_bounds = array<i64: 2, 128, 384>}, {pipeline_mode = #tpu.pipeline_mode<synchronous>, transform_indices = @transform_4, window_bounds = array<i64: 2, 1, 384>}, {pipeline_mode = #tpu.pipeline_mode<synchronous>, transform_indices = @transform_5, window_bounds = array<i64: 2, 1, 384>}, {pipeline_mode = #tpu.pipeline_mode<synchronous>, transform_indices = @transform_6, window_bounds = array<i64: 128, 128>}, {pipeline_mode = #tpu.pipeline_mode<synchronous>, transform_indices = @transform_7, window_bounds = array<i64: 1, 128>}, {pipeline_mode = #tpu.pipeline_mode<synchronous>, transform_indices = @transform_8, window_bounds = array<i64: 1, 128>}, {pipeline_mode = #tpu.pipeline_mode<synchronous>, transform_indices = @transform_9, window_bounds = array<i64: 1, 1>}, {transform_indices = @transform_10, window_bounds = array<i64: 8, 128>}, {transform_indices = @transform_11, window_bounds = array<i64: 8, 128>}]} {
    %c0_i32 = arith.constant 0 : i32
    %0 = arith.cmpi eq, %arg1, %c0_i32 : i32
    %1 = arith.extui %0 : i1 to i32
    %c0_i32_0 = arith.constant 0 : i32
    %2 = arith.cmpi ne, %1, %c0_i32_0 : i32
    scf.if %2 {
      %c0_50 = arith.constant 0 : index
      %c0_51 = arith.constant 0 : index
      %c0_52 = arith.constant 0 : index
      %104 = vector.load %arg3[%c0_50, %c0_51, %c0_52] : memref<2x8x128xf32, #tpu.memory_space<vmem>>, vector<2x8x128xf32>
      %c0_53 = arith.constant 0 : index
      %c0_54 = arith.constant 0 : index
      %c0_55 = arith.constant 0 : index
      %105 = vector.load %arg14[%c0_53, %c0_54, %c0_55] : memref<2x8x128xf32, #tpu.memory_space<vmem>>, vector<2x8x128xf32>
      tpu.vector_store %arg14[%c0_53, %c0_54, %c0_55], %104 {strides = array<i32>} : memref<2x8x128xf32, #tpu.memory_space<vmem>>, vector<2x8x128xf32>,
    } else {
    }
    %c0 = arith.constant 0 : index
    %c0_1 = arith.constant 0 : index
    %c0_2 = arith.constant 0 : index
    %3 = vector.load %arg2[%c0, %c0_1, %c0_2] : memref<1x8x128xbf16, #tpu.memory_space<vmem>>, vector<1x8x128xbf16>
    %4 = vector.shape_cast %3 : vector<1x8x128xbf16> to vector<8x128xbf16>
    %c0_3 = arith.constant 0 : index
    %c0_4 = arith.constant 0 : index
    %c0_5 = arith.constant 0 : index
    %5 = vector.load %arg14[%c0_3, %c0_4, %c0_5] : memref<2x8x128xf32, #tpu.memory_space<vmem>>, vector<1x8x128xf32>
    %6 = vector.shape_cast %5 : vector<1x8x128xf32> to vector<8x128xf32>
    %c0_6 = arith.constant 0 : index
    %c0_7 = arith.constant 0 : index
    %c0_8 = arith.constant 0 : index
    %7 = vector.load %arg4[%c0_6, %c0_7, %c0_8] : memref<2x128x384xbf16, #tpu.memory_space<vmem>>, vector<1x128x384xbf16>
    %8 = vector.shape_cast %7 : vector<1x128x384xbf16> to vector<128x384xbf16>
    %cst = arith.constant dense<0.000000e+00> : vector<8x384xf32>
    %9 = tpu.matmul %4, %8, %cst {dimension_numbers = #tpu.dot_dimension_numbers<[1], [0], [0], [1], [0, 0, 1, 1], [], []>} : vector<8x128xbf16>, vector<128x384xbf16>, vector<8x384xf32> -> vector<8x384xf32>
    %c0_9 = arith.constant 0 : index
    %c0_10 = arith.constant 0 : index
    %c0_11 = arith.constant 0 : index
    %10 = vector.load %arg6[%c0_9, %c0_10, %c0_11] : memref<2x1x384xf32, #tpu.memory_space<vmem>>, vector<1x1x384xf32>
    %11 = vector.shape_cast %10 : vector<1x1x384xf32> to vector<1x384xf32>
    %12 = vector.broadcast %11 : vector<1x384xf32> to vector<8x384xf32>
    %13 = arith.addf %9, %12 : vector<8x384xf32>
    %14 = arith.truncf %6 : vector<8x128xf32> to vector<8x128xbf16>
    %c0_12 = arith.constant 0 : index
    %c0_13 = arith.constant 0 : index
    %c0_14 = arith.constant 0 : index
    %15 = vector.load %arg5[%c0_12, %c0_13, %c0_14] : memref<2x128x384xbf16, #tpu.memory_space<vmem>>, vector<1x128x384xbf16>
    %16 = vector.shape_cast %15 : vector<1x128x384xbf16> to vector<128x384xbf16>
    %cst_15 = arith.constant dense<0.000000e+00> : vector<8x384xf32>
    %17 = tpu.matmul %14, %16, %cst_15 {dimension_numbers = #tpu.dot_dimension_numbers<[1], [0], [0], [1], [0, 0, 1, 1], [], []>} : vector<8x128xbf16>, vector<128x384xbf16>, vector<8x384xf32> -> vector<8x384xf32>
    %c0_16 = arith.constant 0 : index
    %c0_17 = arith.constant 0 : index
    %c0_18 = arith.constant 0 : index
    %18 = vector.load %arg7[%c0_16, %c0_17, %c0_18] : memref<2x1x384xf32, #tpu.memory_space<vmem>>, vector<1x1x384xf32>
    %19 = vector.shape_cast %18 : vector<1x1x384xf32> to vector<1x384xf32>
    %20 = vector.broadcast %19 : vector<1x384xf32> to vector<8x384xf32>
    %21 = arith.addf %17, %20 : vector<8x384xf32>
    %22 = vector.extract_strided_slice %13 {offsets = [0, 0], sizes = [8, 128], strides = [1, 1]} : vector<8x384xf32> to vector<8x128xf32>
    %23 = vector.extract_strided_slice %21 {offsets = [0, 0], sizes = [8, 128], strides = [1, 1]} : vector<8x384xf32> to vector<8x128xf32>
    %24 = arith.addf %22, %23 : vector<8x128xf32>
    %25 = arith.negf %24 : vector<8x128xf32>
    %26 = math.exp %25 : vector<8x128xf32>
    %cst_19 = arith.constant 1.000000e+00 : f32
    %27 = vector.broadcast %cst_19 : f32 to vector<8x128xf32>
    %28 = arith.addf %27, %26 : vector<8x128xf32>
    %29 = arith.divf %27, %28 : vector<8x128xf32>
    %30 = vector.extract_strided_slice %13 {offsets = [0, 128], sizes = [8, 128], strides = [1, 1]} : vector<8x384xf32> to vector<8x128xf32>
    %31 = vector.extract_strided_slice %21 {offsets = [0, 128], sizes = [8, 128], strides = [1, 1]} : vector<8x384xf32> to vector<8x128xf32>
    %32 = arith.addf %30, %31 : vector<8x128xf32>
    %33 = arith.negf %32 : vector<8x128xf32>
    %34 = math.exp %33 : vector<8x128xf32>
    %cst_20 = arith.constant 1.000000e+00 : f32
    %35 = vector.broadcast %cst_20 : f32 to vector<8x128xf32>
    %36 = arith.addf %35, %34 : vector<8x128xf32>
    %37 = arith.divf %35, %36 : vector<8x128xf32>
    %38 = vector.extract_strided_slice %13 {offsets = [0, 256], sizes = [8, 128], strides = [1, 1]} : vector<8x384xf32> to vector<8x128xf32>
    %39 = vector.extract_strided_slice %21 {offsets = [0, 256], sizes = [8, 128], strides = [1, 1]} : vector<8x384xf32> to vector<8x128xf32>
    %40 = arith.mulf %29, %39 : vector<8x128xf32>
    %41 = arith.addf %38, %40 : vector<8x128xf32>
    %42 = math.tanh %41 : vector<8x128xf32>
    %cst_21 = arith.constant 1.000000e+00 : f32
    %43 = vector.broadcast %cst_21 : f32 to vector<8x128xf32>
    %44 = arith.subf %43, %37 : vector<8x128xf32>
    %45 = arith.mulf %44, %42 : vector<8x128xf32>
    %46 = arith.mulf %37, %6 : vector<8x128xf32>
    %47 = arith.addf %45, %46 : vector<8x128xf32>
    %c0_22 = arith.constant 0 : index
    %c0_23 = arith.constant 0 : index
    %c0_24 = arith.constant 0 : index
    %48 = vector.load %arg14[%c0_22, %c0_23, %c0_24] : memref<2x8x128xf32, #tpu.memory_space<vmem>>, vector<1x8x128xf32>
    %49 = vector.shape_cast %48 : vector<1x8x128xf32> to vector<8x128xf32>
    %50 = vector.shape_cast %47 : vector<8x128xf32> to vector<1x8x128xf32>
    tpu.vector_store %arg14[%c0_22, %c0_23, %c0_24], %50 {strides = array<i32>} : memref<2x8x128xf32, #tpu.memory_space<vmem>>, vector<1x8x128xf32>,
    %51 = arith.truncf %47 : vector<8x128xf32> to vector<8x128xbf16>
    %c1 = arith.constant 1 : index
    %c0_25 = arith.constant 0 : index
    %c0_26 = arith.constant 0 : index
    %52 = vector.load %arg14[%c1, %c0_25, %c0_26] : memref<2x8x128xf32, #tpu.memory_space<vmem>>, vector<1x8x128xf32>
    %53 = vector.shape_cast %52 : vector<1x8x128xf32> to vector<8x128xf32>
    %c1_27 = arith.constant 1 : index
    %c0_28 = arith.constant 0 : index
    %c0_29 = arith.constant 0 : index
    %54 = vector.load %arg4[%c1_27, %c0_28, %c0_29] : memref<2x128x384xbf16, #tpu.memory_space<vmem>>, vector<1x128x384xbf16>
    %55 = vector.shape_cast %54 : vector<1x128x384xbf16> to vector<128x384xbf16>
    %cst_30 = arith.constant dense<0.000000e+00> : vector<8x384xf32>
    %56 = tpu.matmul %51, %55, %cst_30 {dimension_numbers = #tpu.dot_dimension_numbers<[1], [0], [0], [1], [0, 0, 1, 1], [], []>} : vector<8x128xbf16>, vector<128x384xbf16>, vector<8x384xf32> -> vector<8x384xf32>
    %c1_31 = arith.constant 1 : index
    %c0_32 = arith.constant 0 : index
    %c0_33 = arith.constant 0 : index
    %57 = vector.load %arg6[%c1_31, %c0_32, %c0_33] : memref<2x1x384xf32, #tpu.memory_space<vmem>>, vector<1x1x384xf32>
    %58 = vector.shape_cast %57 : vector<1x1x384xf32> to vector<1x384xf32>
    %59 = vector.broadcast %58 : vector<1x384xf32> to vector<8x384xf32>
    %60 = arith.addf %56, %59 : vector<8x384xf32>
    %61 = arith.truncf %53 : vector<8x128xf32> to vector<8x128xbf16>
    %c1_34 = arith.constant 1 : index
    %c0_35 = arith.constant 0 : index
    %c0_36 = arith.constant 0 : index
    %62 = vector.load %arg5[%c1_34, %c0_35, %c0_36] : memref<2x128x384xbf16, #tpu.memory_space<vmem>>, vector<1x128x384xbf16>
    %63 = vector.shape_cast %62 : vector<1x128x384xbf16> to vector<128x384xbf16>
    %cst_37 = arith.constant dense<0.000000e+00> : vector<8x384xf32>
    %64 = tpu.matmul %61, %63, %cst_37 {dimension_numbers = #tpu.dot_dimension_numbers<[1], [0], [0], [1], [0, 0, 1, 1], [], []>} : vector<8x128xbf16>, vector<128x384xbf16>, vector<8x384xf32> -> vector<8x384xf32>
    %c1_38 = arith.constant 1 : index
    %c0_39 = arith.constant 0 : index
    %c0_40 = arith.constant 0 : index
    %65 = vector.load %arg7[%c1_38, %c0_39, %c0_40] : memref<2x1x384xf32, #tpu.memory_space<vmem>>, vector<1x1x384xf32>
    %66 = vector.shape_cast %65 : vector<1x1x384xf32> to vector<1x384xf32>
    %67 = vector.broadcast %66 : vector<1x384xf32> to vector<8x384xf32>
    %68 = arith.addf %64, %67 : vector<8x384xf32>
    %69 = vector.extract_strided_slice %60 {offsets = [0, 0], sizes = [8, 128], strides = [1, 1]} : vector<8x384xf32> to vector<8x128xf32>
    %70 = vector.extract_strided_slice %68 {offsets = [0, 0], sizes = [8, 128], strides = [1, 1]} : vector<8x384xf32> to vector<8x128xf32>
    %71 = arith.addf %69, %70 : vector<8x128xf32>
    %72 = arith.negf %71 : vector<8x128xf32>
    %73 = math.exp %72 : vector<8x128xf32>
    %cst_41 = arith.constant 1.000000e+00 : f32
    %74 = vector.broadcast %cst_41 : f32 to vector<8x128xf32>
    %75 = arith.addf %74, %73 : vector<8x128xf32>
    %76 = arith.divf %74, %75 : vector<8x128xf32>
    %77 = vector.extract_strided_slice %60 {offsets = [0, 128], sizes = [8, 128], strides = [1, 1]} : vector<8x384xf32> to vector<8x128xf32>
    %78 = vector.extract_strided_slice %68 {offsets = [0, 128], sizes = [8, 128], strides = [1, 1]} : vector<8x384xf32> to vector<8x128xf32>
    %79 = arith.addf %77, %78 : vector<8x128xf32>
    %80 = arith.negf %79 : vector<8x128xf32>
    %81 = math.exp %80 : vector<8x128xf32>
    %cst_42 = arith.constant 1.000000e+00 : f32
    %82 = vector.broadcast %cst_42 : f32 to vector<8x128xf32>
    %83 = arith.addf %82, %81 : vector<8x128xf32>
    %84 = arith.divf %82, %83 : vector<8x128xf32>
    %85 = vector.extract_strided_slice %60 {offsets = [0, 256], sizes = [8, 128], strides = [1, 1]} : vector<8x384xf32> to vector<8x128xf32>
    %86 = vector.extract_strided_slice %68 {offsets = [0, 256], sizes = [8, 128], strides = [1, 1]} : vector<8x384xf32> to vector<8x128xf32>
    %87 = arith.mulf %76, %86 : vector<8x128xf32>
    %88 = arith.addf %85, %87 : vector<8x128xf32>
    %89 = math.tanh %88 : vector<8x128xf32>
    %cst_43 = arith.constant 1.000000e+00 : f32
    %90 = vector.broadcast %cst_43 : f32 to vector<8x128xf32>
    %91 = arith.subf %90, %84 : vector<8x128xf32>
    %92 = arith.mulf %91, %89 : vector<8x128xf32>
    %93 = arith.mulf %84, %53 : vector<8x128xf32>
    %94 = arith.addf %92, %93 : vector<8x128xf32>
    %c1_44 = arith.constant 1 : index
    %c0_45 = arith.constant 0 : index
    %c0_46 = arith.constant 0 : index
    %95 = vector.load %arg14[%c1_44, %c0_45, %c0_46] : memref<2x8x128xf32, #tpu.memory_space<vmem>>, vector<1x8x128xf32>
    %96 = vector.shape_cast %95 : vector<1x8x128xf32> to vector<8x128xf32>
    %97 = vector.shape_cast %94 : vector<8x128xf32> to vector<1x8x128xf32>
    tpu.vector_store %arg14[%c1_44, %c0_45, %c0_46], %97 {strides = array<i32>} : memref<2x8x128xf32, #tpu.memory_space<vmem>>, vector<1x8x128xf32>,
    %c0_i32_47 = arith.constant 0 : i32
    %98 = arith.cmpi eq, %arg1, %c0_i32_47 : i32
    %99 = arith.extui %98 : i1 to i32
    %c0_i32_48 = arith.constant 0 : i32
    %100 = arith.cmpi ne, %99, %c0_i32_48 : i32
    scf.if %100 {
      %c0_50 = arith.constant 0 : index
      %c0_51 = arith.constant 0 : index
      %c0_52 = arith.constant 0 : index
      %104 = vector.load %arg14[%c0_50, %c0_51, %c0_52] : memref<2x8x128xf32, #tpu.memory_space<vmem>>, vector<1x8x128xf32>
      %105 = vector.shape_cast %104 : vector<1x8x128xf32> to vector<8x128xf32>
      %c0_53 = arith.constant 0 : index
      %c0_54 = arith.constant 0 : index
      %106 = vector.load %arg12[%c0_53, %c0_54] : memref<8x128xf32, #tpu.memory_space<vmem>>, vector<8x128xf32>
      tpu.vector_store %arg12[%c0_53, %c0_54], %105 {strides = array<i32>} : memref<8x128xf32, #tpu.memory_space<vmem>>, vector<8x128xf32>,
    } else {
    }
    %c3_i32 = arith.constant 3 : i32
    %101 = arith.cmpi eq, %arg1, %c3_i32 : i32
    %102 = arith.extui %101 : i1 to i32
    %c0_i32_49 = arith.constant 0 : i32
    %103 = arith.cmpi ne, %102, %c0_i32_49 : i32
    scf.if %103 {
      %c1_50 = arith.constant 1 : index
      %c0_51 = arith.constant 0 : index
      %c0_52 = arith.constant 0 : index
      %104 = vector.load %arg14[%c1_50, %c0_51, %c0_52] : memref<2x8x128xf32, #tpu.memory_space<vmem>>, vector<1x8x128xf32>
      %105 = vector.shape_cast %104 : vector<1x8x128xf32> to vector<8x128xf32>
      %106 = arith.truncf %105 : vector<8x128xf32> to vector<8x128xbf16>
      %c0_53 = arith.constant 0 : index
      %c0_54 = arith.constant 0 : index
      %107 = vector.load %arg8[%c0_53, %c0_54] : memref<128x128xbf16, #tpu.memory_space<vmem>>, vector<128x128xbf16>
      %cst_55 = arith.constant dense<0.000000e+00> : vector<8x128xf32>
      %108 = tpu.matmul %106, %107, %cst_55 {dimension_numbers = #tpu.dot_dimension_numbers<[1], [0], [0], [1], [0, 0, 1, 1], [], []>} : vector<8x128xbf16>, vector<128x128xbf16>, vector<8x128xf32> -> vector<8x128xf32>
      %c0_56 = arith.constant 0 : index
      %c0_57 = arith.constant 0 : index
      %109 = vector.load %arg9[%c0_56, %c0_57] : memref<1x128xf32, #tpu.memory_space<vmem>>, vector<1x128xf32>
      %110 = vector.broadcast %109 : vector<1x128xf32> to vector<8x128xf32>
      %111 = arith.addf %108, %110 : vector<8x128xf32>
      %cst_58 = arith.constant 0.000000e+00 : f32
      %112 = vector.broadcast %cst_58 : f32 to vector<8x128xf32>
      %113 = arith.maximumf %111, %112 : vector<8x128xf32>
      %c0_59 = arith.constant 0 : index
      %c0_60 = arith.constant 0 : index
      %114 = vector.load %arg10[%c0_59, %c0_60] : memref<1x128xf32, #tpu.memory_space<vmem>>, vector<1x128xf32>
      %115 = vector.broadcast %114 : vector<1x128xf32> to vector<8x128xf32>
      %116 = arith.mulf %113, %115 : vector<8x128xf32>
      %cst_61 = arith.constant dense<0.000000e+00> : vector<8xf32>
      %117 = vector.multi_reduction <add>, %116, %cst_61 [1] : vector<8x128xf32> to vector<8xf32>
      %118 = vector.shape_cast %117 : vector<8xf32> to vector<8x1xf32>
      %c0_62 = arith.constant 0 : index
      %c0_63 = arith.constant 0 : index
      %119 = vector.load %arg11[%c0_62, %c0_63] : memref<1x1xf32, #tpu.memory_space<vmem>>, vector<1x1xf32>
      %120 = vector.broadcast %119 : vector<1x1xf32> to vector<8x1xf32>
      %121 = arith.addf %118, %120 : vector<8x1xf32>
      %122 = vector.shape_cast %121 : vector<8x1xf32> to vector<8x1xf32>
      %123 = vector.broadcast %122 : vector<8x1xf32> to vector<8x128xf32>
      %c0_64 = arith.constant 0 : index
      %c0_65 = arith.constant 0 : index
      %124 = vector.load %arg13[%c0_64, %c0_65] : memref<8x128xf32, #tpu.memory_space<vmem>>, vector<8x128xf32>
      tpu.vector_store %arg13[%c0_64, %c0_65], %123 {strides = array<i32>} : memref<8x128xf32, #tpu.memory_space<vmem>>, vector<8x128xf32>,
    } else {
    }
    return
  }
  func.func @transform_0(%arg0: i32, %arg1: i32) -> (i32, i32, i32) {
    %c0_i32 = arith.constant 0 : i32
    %c0_i32_0 = arith.constant 0 : i32
    return %arg1, %arg0, %c0_i32 : i32, i32, i32
  }
  func.func @transform_1(%arg0: i32, %arg1: i32) -> (i32, i32, i32) {
    %c0_i32 = arith.constant 0 : i32
    %c0_i32_0 = arith.constant 0 : i32
    %c0_i32_1 = arith.constant 0 : i32
    return %c0_i32, %arg0, %c0_i32_0 : i32, i32, i32
  }
  func.func @transform_2(%arg0: i32, %arg1: i32) -> (i32, i32, i32) {
    %c0_i32 = arith.constant 0 : i32
    %c0_i32_0 = arith.constant 0 : i32
    %c0_i32_1 = arith.constant 0 : i32
    %c0_i32_2 = arith.constant 0 : i32
    return %c0_i32, %c0_i32_0, %c0_i32_1 : i32, i32, i32
  }
  func.func @transform_3(%arg0: i32, %arg1: i32) -> (i32, i32, i32) {
    %c0_i32 = arith.constant 0 : i32
    %c0_i32_0 = arith.constant 0 : i32
    %c0_i32_1 = arith.constant 0 : i32
    %c0_i32_2 = arith.constant 0 : i32
    return %c0_i32, %c0_i32_0, %c0_i32_1 : i32, i32, i32
  }
  func.func @transform_4(%arg0: i32, %arg1: i32) -> (i32, i32, i32) {
    %c0_i32 = arith.constant 0 : i32
    %c0_i32_0 = arith.constant 0 : i32
    %c0_i32_1 = arith.constant 0 : i32
    %c0_i32_2 = arith.constant 0 : i32
    return %c0_i32, %c0_i32_0, %c0_i32_1 : i32, i32, i32
  }
  func.func @transform_5(%arg0: i32, %arg1: i32) -> (i32, i32, i32) {
    %c0_i32 = arith.constant 0 : i32
    %c0_i32_0 = arith.constant 0 : i32
    %c0_i32_1 = arith.constant 0 : i32
    %c0_i32_2 = arith.constant 0 : i32
    return %c0_i32, %c0_i32_0, %c0_i32_1 : i32, i32, i32
  }
  func.func @transform_6(%arg0: i32, %arg1: i32) -> (i32, i32) {
    %c0_i32 = arith.constant 0 : i32
    %c0_i32_0 = arith.constant 0 : i32
    %c0_i32_1 = arith.constant 0 : i32
    return %c0_i32, %c0_i32_0 : i32, i32
  }
  func.func @transform_7(%arg0: i32, %arg1: i32) -> (i32, i32) {
    %c0_i32 = arith.constant 0 : i32
    %c0_i32_0 = arith.constant 0 : i32
    %c0_i32_1 = arith.constant 0 : i32
    return %c0_i32, %c0_i32_0 : i32, i32
  }
  func.func @transform_8(%arg0: i32, %arg1: i32) -> (i32, i32) {
    %c0_i32 = arith.constant 0 : i32
    %c0_i32_0 = arith.constant 0 : i32
    %c0_i32_1 = arith.constant 0 : i32
    return %c0_i32, %c0_i32_0 : i32, i32
  }
  func.func @transform_9(%arg0: i32, %arg1: i32) -> (i32, i32) {
    %c0_i32 = arith.constant 0 : i32
    %c0_i32_0 = arith.constant 0 : i32
    %c0_i32_1 = arith.constant 0 : i32
    return %c0_i32, %c0_i32_0 : i32, i32
  }
  func.func @transform_10(%arg0: i32, %arg1: i32) -> (i32, i32) {
    %c0_i32 = arith.constant 0 : i32
    %c0_i32_0 = arith.constant 0 : i32
    return %arg0, %c0_i32 : i32, i32
  }
  func.func @transform_11(%arg0: i32, %arg1: i32) -> (i32, i32) {
    %c0_i32 = arith.constant 0 : i32
    %c0_i32_0 = arith.constant 0 : i32
    return %arg0, %c0_i32 : i32, i32
  }
}

</mosaic_0001>

<llo_original>
// kernel: _fused_gru_decoder.1
$region0: #{_fused_gru_decoder.1}
  #allocation0 [shape = 'u32[]', space=smem, size = 0x4, offset = 0x4, fixed_abs, tag = 'smem constant byte address 0x4 - core index']
  #allocation1 [shape = 'u32[144,128]{1,0:T(1,128)}', space=vmem, size = 0x12000, scoped, tag = 'internal scratch']
  #allocation2 [shape = 'f32[2,8,128]{2,1,0:T(8,128)}', space=vmem, size = 0x2000, scoped, tag = 'scratch operand']
  #allocation3 [shape = 'f32[1,1]{1,0:T(1,128)S(1)}', space=vmem, size = 0x200, scoped, tag = 'scoped memory for _fused_gru_decoder.1']
  %s0 = inlined_call_operand.hbm [shape: bf16[4,8,128], index: 0, kind: input, shape index: {}]
  %s1 = inlined_call_operand.hbm [shape: f32[2,8,128], index: 1, kind: input, shape index: {}]
  %s2 = inlined_call_operand.hbm [shape: bf16[2,128,384], index: 2, kind: input, shape index: {}]
  %s3 = inlined_call_operand.hbm [shape: bf16[2,128,384], index: 3, kind: input, shape index: {}]
  %s4 = inlined_call_operand.vmem [shape: f32[2,1,384], index: 4, kind: input, shape index: {}]
  %s5 = inlined_call_operand.hbm [shape: f32[2,1,384], index: 5, kind: input, shape index: {}]
  %s6 = inlined_call_operand.hbm [shape: bf16[128,128], index: 6, kind: input, shape index: {}]
  %s7 = inlined_call_operand.vmem [shape: f32[1,128], index: 7, kind: input, shape index: {}]
  %s8 = inlined_call_operand.vmem [shape: f32[1,128], index: 8, kind: input, shape index: {}]
  %s9 = inlined_call_operand.<no memory space> [shape: f32[1,1], index: 9, kind: input, shape index: {}]
  %s10 = inlined_call_operand.hbm [shape: f32[8,128], index: 10, kind: output, shape index: {0}]
  %s11 = inlined_call_operand.hbm [shape: f32[8,128], index: 11, kind: output, shape index: {1}]
  %12 = xla_tuple %s10, %s11
  %s13 = sld [smem:[#allocation0]]
  $region117: #{_fused_gru_decoder.1} parent=0
    _
  %s15 = ssub.s32 1, %s13
  %s16 = scalar_select 0, %s15, %s13
  %v17 = vstv %s9
  %18 = vst [vmem:[#allocation3] sm:$0x1] %v17
  $region1: #{_fused_gru_decoder.1} parent=0
    #allocation4 [shape = 'u8[4096]{0}', space=vmem, size = 0x1000, scoped, tag = 'input window, operand 0']
    #allocation5 [shape = 's32[2]{0}', space=sflag, size = 0x8, scoped, tag = 'scoped memory for _fused_gru_decoder.1']
    #allocation6 [shape = 's32[2]{0}', space=sflag, size = 0x8, scoped, tag = 'scoped memory for _fused_gru_decoder.1']
    #allocation7 [shape = 'u8[8192]{0}', space=vmem, size = 0x2000, scoped, tag = 'input window, operand 1, single buffered']
    #allocation8 [shape = 's32[1]{0}', space=sflag, size = 0x4, scoped, tag = 'scoped memory for _fused_gru_decoder.1']
    #allocation9 [shape = 'u8[196608]{0}', space=vmem, size = 0x30000, scoped, tag = 'input window, operand 2, single buffered']
    #allocation10 [shape = 'u8[196608]{0}', space=vmem, size = 0x30000, scoped, tag = 'input window, operand 3, single buffered']
    #allocation11 [shape = 's32[1]{0}', space=sflag, size = 0x4, scoped, tag = 'scoped memory for _fused_gru_decoder.1']
    #allocation12 [shape = 'u8[3072]{0}', space=vmem, size = 0xc00, scoped, tag = 'input window, operand 5, single buffered']
    #allocation13 [shape = 'u8[32768]{0}', space=vmem, size = 0x8000, scoped, tag = 'input window, operand 6, single buffered']
    #allocation14 [shape = 's32[1]{0}', space=sflag, size = 0x4, scoped, tag = 'scoped memory for _fused_gru_decoder.1']
    #allocation15 [shape = 'u8[4096]{0}', space=vmem, size = 0x1000, scoped, tag = 'output window, operand 0, single buffered']
    #allocation16 [shape = 'u8[4096]{0}', space=vmem, size = 0x1000, scoped, tag = 'output window, operand 1, single buffered']
    #allocation17 [shape = 's32[1]{0}', space=sflag, size = 0x4, scoped, tag = 'scoped memory for _fused_gru_decoder.1']
    %19 = vsyncpa [#allocation5], 0
    %s20 = scalar_lea.sflag [#allocation5], 1
    %21 = vsyncpa %s20, 0
    %22 = vsyncpa [#allocation8], 0
    %23 = vsyncpa [#allocation11], 0
    %24 = vsyncpa [#allocation14], 0
    %25 = vsyncpa [#allocation6], 0
    %26 = vsyncpa [#allocation17], 0
    loop: start=0, step=1, limit=6
    $region2: #{_fused_gru_decoder.1} parent=1 // loop_pre_header
      _
    $region3: #{_fused_gru_decoder.1} parent=1 // loop_header
      %s28 = sphi 0, %s32
      %p29 = scmp.ge.s32.totalorder %s28, 6
      %s35 = sphi 0, %s47
      %s36 = sphi 0, %s43
      %s37 = sphi 0, %s35
      %s38 = sphi 0, %s36
      %s39 = sphi 0, %s37
      %s40 = sphi 0, %s38
      %s52 = sphi 0, %s54
      %s55 = sphi 0, %s52
      %s56 = sphi 0, %s55
      %s72 = sphi 0, %s56
      %s78 = sphi 0, %s80
      %s81 = sphi 0, %s78
      %s82 = sphi 0, %s81
      %s98 = sphi 0, %s82
      %s102 = sphi 0, %s102
      %s104 = sphi 0, %s102
      %s105 = sphi 0, %s104
      %s119 = sphi 0, %s105
      %s123 = sphi 0, %s123
      %s125 = sphi 0, %s123
      %s126 = sphi 0, %s125
      %s140 = sphi 0, %s126
      %s144 = sphi 0, %s144
      %s146 = sphi 0, %s144
      %s147 = sphi 0, %s146
      %s161 = sphi 0, %s147
      %s165 = sphi 0, %s165
      %s167 = sphi 0, %s165
      %s168 = sphi 0, %s167
      %s182 = sphi 0, %s168
      %s186 = sphi 0, %s186
      %s188 = sphi 0, %s186
      %s189 = sphi 0, %s188
      %s203 = sphi 0, %s189
      %s207 = sphi 0, %s207
      %s209 = sphi 0, %s207
      %s210 = sphi 0, %s209
      %s224 = sphi 0, %s210
      %s228 = sphi 0, %s228
      %s230 = sphi 0, %s228
      %s231 = sphi 0, %s230
      %s245 = sphi 0, %s231
      %s249 = sphi 0, %s249
      %s251 = sphi 0, %s249
      %s252 = sphi 0, %s251
      %s266 = sphi 0, %s252
      %s272 = sphi 0, %s274
      %s275 = sphi 0, %s272
      %s276 = sphi 0, %s275
      %s292 = sphi 0, %s276
      %s298 = sphi 0, %s300
      %s301 = sphi 0, %s298
      %s302 = sphi 0, %s301
      %s318 = sphi 0, %s302
    $region4: #{_fused_gru_decoder.1} parent=1 // loop_header_branch
      %31 = sbr.rel (%p29) target = $region8
    $region5: #{_fused_gru_decoder.1} parent=1 // loop_body
      %s33 = ssub.s32 %s28, 1
      %s34 = ssub.s32 %s28, 2
      %s41 = sadd.s32 1, %s36
      %p42 = scmp.ge.s32.totalorder %s41, 4
      %s43 = scalar_select %p42, 0, %s41
      %s44 = sadd.s32 1, %s35
      %s45 = scalar_select %p42, %s44, %s35
      %p46 = scmp.ge.s32.totalorder %s45, 1
      %s47 = scalar_select %p46, 0, %s45
      %s48 = ssub.s32 %s36, %s43
      %s49 = ssub.s32 %s35, %s47
      %s50 = sor.u32 %s48, %s49
      %p51 = scmp.eq.s32.totalorder %s50, 0
      %s53 = sadd.s32 %s52, 1
      %s54 = scalar_select %p51, %s52, %s53
      %p57 = pneg %p51
      %p58 = scmp.eq.s32.totalorder %s28, 3
      %p59 = por %p57, %p58
      %p60 = scmp.ne.s32.totalorder %s52, %s55
      %p61 = scmp.eq.s32.totalorder %s28, 0
      %p62 = por %p60, %p61
      %p63 = scmp.ne.s32.totalorder %s52, %s55
      %p64 = scmp.eq.s32.totalorder %s33, 3
      %p65 = por %p63, %p64
      %p66 = scmp.ne.s32.totalorder %s55, %s56
      %p67 = scmp.eq.s32.totalorder %s33, 0
      %p68 = por %p66, %p67
      %p69 = scmp.ne.s32.totalorder %s55, %s56
      %p70 = scmp.eq.s32.totalorder %s34, 3
      %p71 = por %p69, %p70
      %p73 = scmp.ne.s32.totalorder %s56, %s72
      %p74 = scmp.eq.s32.totalorder %s34, 0
      %p75 = por %p73, %p74
      %s76 = ssub.s32 %s35, %s47
      %p77 = scmp.eq.s32.totalorder %s76, 0
      %s79 = sadd.s32 %s78, 1
      %s80 = scalar_select %p77, %s78, %s79
      %p83 = pneg %p77
      %p84 = scmp.eq.s32.totalorder %s28, 3
      %p85 = por %p83, %p84
      %p86 = scmp.ne.s32.totalorder %s78, %s81
      %p87 = scmp.eq.s32.totalorder %s28, 0
      %p88 = por %p86, %p87
      %p89 = scmp.ne.s32.totalorder %s78, %s81
      %p90 = scmp.eq.s32.totalorder %s33, 3
      %p91 = por %p89, %p90
      %p92 = scmp.ne.s32.totalorder %s81, %s82
      %p93 = scmp.eq.s32.totalorder %s33, 0
      %p94 = por %p92, %p93
      %p95 = scmp.ne.s32.totalorder %s81, %s82
      %p96 = scmp.eq.s32.totalorder %s34, 3
      %p97 = por %p95, %p96
      %p99 = scmp.ne.s32.totalorder %s82, %s98
      %p100 = scmp.eq.s32.totalorder %s34, 0
      %p101 = por %p99, %p100
      %s103 = sadd.s32 %s102, 1
      %p106 = scmp.eq.s32.totalorder %s28, 3
      %p107 = scmp.ne.s32.totalorder %s102, %s104
      %p108 = scmp.eq.s32.totalorder %s28, 0
      %p109 = por %p107, %p108
      %p110 = scmp.ne.s32.totalorder %s102, %s104
      %p111 = scmp.eq.s32.totalorder %s33, 3
      %p112 = por %p110, %p111
      %p113 = scmp.ne.s32.totalorder %s104, %s105
      %p114 = scmp.eq.s32.totalorder %s33, 0
      %p115 = por %p113, %p114
      %p116 = scmp.ne.s32.totalorder %s104, %s105
      %p117 = scmp.eq.s32.totalorder %s34, 3
      %p118 = por %p116, %p117
      %p120 = scmp.ne.s32.totalorder %s105, %s119
      %p121 = scmp.eq.s32.totalorder %s34, 0
      %p122 = por %p120, %p121
      %s124 = sadd.s32 %s123, 1
      %p127 = scmp.eq.s32.totalorder %s28, 3
      %p128 = scmp.ne.s32.totalorder %s123, %s125
      %p129 = scmp.eq.s32.totalorder %s28, 0
      %p130 = por %p128, %p129
      %p131 = scmp.ne.s32.totalorder %s123, %s125
      %p132 = scmp.eq.s32.totalorder %s33, 3
      %p133 = por %p131, %p132
      %p134 = scmp.ne.s32.totalorder %s125, %s126
      %p135 = scmp.eq.s32.totalorder %s33, 0
      %p136 = por %p134, %p135
      %p137 = scmp.ne.s32.totalorder %s125, %s126
      %p138 = scmp.eq.s32.totalorder %s34, 3
      %p139 = por %p137, %p138
      %p141 = scmp.ne.s32.totalorder %s126, %s140
      %p142 = scmp.eq.s32.totalorder %s34, 0
      %p143 = por %p141, %p142
      %s145 = sadd.s32 %s144, 1
      %p148 = scmp.eq.s32.totalorder %s28, 3
      %p149 = scmp.ne.s32.totalorder %s144, %s146
      %p150 = scmp.eq.s32.totalorder %s28, 0
      %p151 = por %p149, %p150
      %p152 = scmp.ne.s32.totalorder %s144, %s146
      %p153 = scmp.eq.s32.totalorder %s33, 3
      %p154 = por %p152, %p153
      %p155 = scmp.ne.s32.totalorder %s146, %s147
      %p156 = scmp.eq.s32.totalorder %s33, 0
      %p157 = por %p155, %p156
      %p158 = scmp.ne.s32.totalorder %s146, %s147
      %p159 = scmp.eq.s32.totalorder %s34, 3
      %p160 = por %p158, %p159
      %p162 = scmp.ne.s32.totalorder %s147, %s161
      %p163 = scmp.eq.s32.totalorder %s34, 0
      %p164 = por %p162, %p163
      %s166 = sadd.s32 %s165, 1
      %p169 = scmp.eq.s32.totalorder %s28, 3
      %p170 = scmp.ne.s32.totalorder %s165, %s167
      %p171 = scmp.eq.s32.totalorder %s28, 0
      %p172 = por %p170, %p171
      %p173 = scmp.ne.s32.totalorder %s165, %s167
      %p174 = scmp.eq.s32.totalorder %s33, 3
      %p175 = por %p173, %p174
      %p176 = scmp.ne.s32.totalorder %s167, %s168
      %p177 = scmp.eq.s32.totalorder %s33, 0
      %p178 = por %p176, %p177
      %p179 = scmp.ne.s32.totalorder %s167, %s168
      %p180 = scmp.eq.s32.totalorder %s34, 3
      %p181 = por %p179, %p180
      %p183 = scmp.ne.s32.totalorder %s168, %s182
      %p184 = scmp.eq.s32.totalorder %s34, 0
      %p185 = por %p183, %p184
      %s187 = sadd.s32 %s186, 1
      %p190 = scmp.eq.s32.totalorder %s28, 3
      %p191 = scmp.ne.s32.totalorder %s186, %s188
      %p192 = scmp.eq.s32.totalorder %s28, 0
      %p193 = por %p191, %p192
      %p194 = scmp.ne.s32.totalorder %s186, %s188
      %p195 = scmp.eq.s32.totalorder %s33, 3
      %p196 = por %p194, %p195
      %p197 = scmp.ne.s32.totalorder %s188, %s189
      %p198 = scmp.eq.s32.totalorder %s33, 0
      %p199 = por %p197, %p198
      %p200 = scmp.ne.s32.totalorder %s188, %s189
      %p201 = scmp.eq.s32.totalorder %s34, 3
      %p202 = por %p200, %p201
      %p204 = scmp.ne.s32.totalorder %s189, %s203
      %p205 = scmp.eq.s32.totalorder %s34, 0
      %p206 = por %p204, %p205
      %s208 = sadd.s32 %s207, 1
      %p211 = scmp.eq.s32.totalorder %s28, 3
      %p212 = scmp.ne.s32.totalorder %s207, %s209
      %p213 = scmp.eq.s32.totalorder %s28, 0
      %p214 = por %p212, %p213
      %p215 = scmp.ne.s32.totalorder %s207, %s209
      %p216 = scmp.eq.s32.totalorder %s33, 3
      %p217 = por %p215, %p216
      %p218 = scmp.ne.s32.totalorder %s209, %s210
      %p219 = scmp.eq.s32.totalorder %s33, 0
      %p220 = por %p218, %p219
      %p221 = scmp.ne.s32.totalorder %s209, %s210
      %p222 = scmp.eq.s32.totalorder %s34, 3
      %p223 = por %p221, %p222
      %p225 = scmp.ne.s32.totalorder %s210, %s224
      %p226 = scmp.eq.s32.totalorder %s34, 0
      %p227 = por %p225, %p226
      %s229 = sadd.s32 %s228, 1
      %p232 = scmp.eq.s32.totalorder %s28, 3
      %p233 = scmp.ne.s32.totalorder %s228, %s230
      %p234 = scmp.eq.s32.totalorder %s28, 0
      %p235 = por %p233, %p234
      %p236 = scmp.ne.s32.totalorder %s228, %s230
      %p237 = scmp.eq.s32.totalorder %s33, 3
      %p238 = por %p236, %p237
      %p239 = scmp.ne.s32.totalorder %s230, %s231
      %p240 = scmp.eq.s32.totalorder %s33, 0
      %p241 = por %p239, %p240
      %p242 = scmp.ne.s32.totalorder %s230, %s231
      %p243 = scmp.eq.s32.totalorder %s34, 3
      %p244 = por %p242, %p243
      %p246 = scmp.ne.s32.totalorder %s231, %s245
      %p247 = scmp.eq.s32.totalorder %s34, 0
      %p248 = por %p246, %p247
      %s250 = sadd.s32 %s249, 1
      %p253 = scmp.eq.s32.totalorder %s28, 3
      %p254 = scmp.ne.s32.totalorder %s249, %s251
      %p255 = scmp.eq.s32.totalorder %s28, 0
      %p256 = por %p254, %p255
      %p257 = scmp.ne.s32.totalorder %s249, %s251
      %p258 = scmp.eq.s32.totalorder %s33, 3
      %p259 = por %p257, %p258
      %p260 = scmp.ne.s32.totalorder %s251, %s252
      %p261 = scmp.eq.s32.totalorder %s33, 0
      %p262 = por %p260, %p261
      %p263 = scmp.ne.s32.totalorder %s251, %s252
      %p264 = scmp.eq.s32.totalorder %s34, 3
      %p265 = por %p263, %p264
      %p267 = scmp.ne.s32.totalorder %s252, %s266
      %p268 = scmp.eq.s32.totalorder %s34, 0
      %p269 = por %p267, %p268
      %s270 = ssub.s32 %s35, %s47
      %p271 = scmp.eq.s32.totalorder %s270, 0
      %s273 = sadd.s32 %s272, 1
      %s274 = scalar_select %p271, %s272, %s273
      %p277 = pneg %p271
      %p278 = scmp.eq.s32.totalorder %s28, 3
      %p279 = por %p277, %p278
      %p280 = scmp.ne.s32.totalorder %s272, %s275
      %p281 = scmp.eq.s32.totalorder %s28, 0
      %p282 = por %p280, %p281
      %p283 = scmp.ne.s32.totalorder %s272, %s275
      %p284 = scmp.eq.s32.totalorder %s33, 3
      %p285 = por %p283, %p284
      %p286 = scmp.ne.s32.totalorder %s275, %s276
      %p287 = scmp.eq.s32.totalorder %s33, 0
      %p288 = por %p286, %p287
      %p289 = scmp.ne.s32.totalorder %s275, %s276
      %p290 = scmp.eq.s32.totalorder %s34, 3
      %p291 = por %p289, %p290
      %p293 = scmp.ne.s32.totalorder %s276, %s292
      %p294 = scmp.eq.s32.totalorder %s34, 0
      %p295 = por %p293, %p294
      %s296 = ssub.s32 %s35, %s47
      %p297 = scmp.eq.s32.totalorder %s296, 0
      %s299 = sadd.s32 %s298, 1
      %s300 = scalar_select %p297, %s298, %s299
      %p303 = pneg %p297
      %p304 = scmp.eq.s32.totalorder %s28, 3
      %p305 = por %p303, %p304
      %p306 = scmp.ne.s32.totalorder %s298, %s301
      %p307 = scmp.eq.s32.totalorder %s28, 0
      %p308 = por %p306, %p307
      %p309 = scmp.ne.s32.totalorder %s298, %s301
      %p310 = scmp.eq.s32.totalorder %s33, 3
      %p311 = por %p309, %p310
      %p312 = scmp.ne.s32.totalorder %s301, %s302
      %p313 = scmp.eq.s32.totalorder %s33, 0
      %p314 = por %p312, %p313
      %p315 = scmp.ne.s32.totalorder %s301, %s302
      %p316 = scmp.eq.s32.totalorder %s34, 3
      %p317 = por %p315, %p316
      %p319 = scmp.ne.s32.totalorder %s302, %s318
      %p320 = scmp.eq.s32.totalorder %s34, 0
      %p321 = por %p319, %p320
      %p322 = scmp.le.s32.totalorder 1, %s28
      %p323 = scmp.lt.s32.totalorder %s28, 5
      %p324 = pnand %p322, %p323
      %p325 = pneg %p324
      // Predicated region
      $region9: #{_fused_gru_decoder.1} parent=5 // pred_check
        _
      $region10: #{_fused_gru_decoder.1} parent=5 // pred_check_branch
        %327 = sbr.rel (%p324) target = $region12
      $region11: #{_fused_gru_decoder.1} parent=5 // pred_region
        %s328 = ssub.s32 %s28, 1
        // Predicated region
        $region13: #{_fused_gru_decoder.1} parent=11 // pred_check
          %p329 = pneg %p94
        $region14: #{_fused_gru_decoder.1} parent=11 // pred_check_branch
          %331 = sbr.rel (%p329) target = $region16
        $region15: #{_fused_gru_decoder.1} parent=11 // pred_region
          %s333 = ssub.s32 256, 256
          %334 = vsyncadd [#allocation8], %s333
          %s335 = smul.addr %s37, 128
          %s336 = scalar_lea.hbm %s1, %s335
          %s337 = sshll.u32 [#allocation7], 4
          %s338 = int_to_ptr.vmem [resolvable:$true] %s337
          %343 = dma.hbm_to_vmem [thread:$0]  %s336, 256, %s338, [#allocation8], 128, 128, 8
        $region16: #{_fused_gru_decoder.1} parent=11 // pred_fallthru
          _
        // Predicated region
        $region17: #{_fused_gru_decoder.1} parent=11 // pred_check
          %p344 = pneg %p115
        $region18: #{_fused_gru_decoder.1} parent=11 // pred_check_branch
          %346 = sbr.rel (%p344) target = $region20
        $region19: #{_fused_gru_decoder.1} parent=11 // pred_region
          %s348 = ssub.s32 6144, 6144
          %349 = vsyncadd [#allocation8], %s348
          %s350 = sshll.u32 [#allocation9], 4
          %s351 = int_to_ptr.vmem [resolvable:$true] %s350
          %356 = dma.hbm_to_vmem [thread:$0]  %s2, 6144, %s351, [#allocation8], 192, 192, 12
        $region20: #{_fused_gru_decoder.1} parent=11 // pred_fallthru
          _
        // Predicated region
        $region21: #{_fused_gru_decoder.1} parent=11 // pred_check
          %p357 = pneg %p136
        $region22: #{_fused_gru_decoder.1} parent=11 // pred_check_branch
          %359 = sbr.rel (%p357) target = $region24
        $region23: #{_fused_gru_decoder.1} parent=11 // pred_region
          %s361 = ssub.s32 6144, 6144
          %362 = vsyncadd [#allocation11], %s361
          %s363 = sshll.u32 [#allocation10], 4
          %s364 = int_to_ptr.vmem [resolvable:$true] %s363
          %369 = dma.hbm_to_vmem [thread:$0]  %s3, 6144, %s364, [#allocation11], 192, 192, 12
        $region24: #{_fused_gru_decoder.1} parent=11 // pred_fallthru
          _
        // Predicated region
        $region25: #{_fused_gru_decoder.1} parent=11 // pred_check
          %p370 = pneg %p157
        $region26: #{_fused_gru_decoder.1} parent=11 // pred_check_branch
          %372 = sbr.rel (%p370) target = $region28
        $region27: #{_fused_gru_decoder.1} parent=11 // pred_region
          _
        $region28: #{_fused_gru_decoder.1} parent=11 // pred_fallthru
          _
        // Predicated region
        $region29: #{_fused_gru_decoder.1} parent=11 // pred_check
          %p373 = pneg %p178
        $region30: #{_fused_gru_decoder.1} parent=11 // pred_check_branch
          %375 = sbr.rel (%p373) target = $region32
        $region31: #{_fused_gru_decoder.1} parent=11 // pred_region
          %s377 = ssub.s32 96, 96
          %378 = vsyncadd [#allocation11], %s377
          %s379 = sshll.u32 [#allocation12], 4
          %s380 = int_to_ptr.vmem [resolvable:$true] %s379
          %385 = dma.hbm_to_vmem [thread:$0]  %s5, 96, %s380, [#allocation11], 48, 48, 3
        $region32: #{_fused_gru_decoder.1} parent=11 // pred_fallthru
          _
        // Predicated region
        $region33: #{_fused_gru_decoder.1} parent=11 // pred_check
          %p386 = pneg %p199
        $region34: #{_fused_gru_decoder.1} parent=11 // pred_check_branch
          %388 = sbr.rel (%p386) target = $region36
        $region35: #{_fused_gru_decoder.1} parent=11 // pred_region
          %s390 = ssub.s32 1024, 1024
          %391 = vsyncadd [#allocation14], %s390
          %s392 = sshll.u32 [#allocation13], 4
          %s393 = int_to_ptr.vmem [resolvable:$true] %s392
          %398 = dma.hbm_to_vmem [thread:$0]  %s6, 1024, %s393, [#allocation14], 64, 64, 4
        $region36: #{_fused_gru_decoder.1} parent=11 // pred_fallthru
          _
        // Predicated region
        $region37: #{_fused_gru_decoder.1} parent=11 // pred_check
          %p399 = pneg %p220
        $region38: #{_fused_gru_decoder.1} parent=11 // pred_check_branch
          %401 = sbr.rel (%p399) target = $region40
        $region39: #{_fused_gru_decoder.1} parent=11 // pred_region
          _
        $region40: #{_fused_gru_decoder.1} parent=11 // pred_fallthru
          _
        // Predicated region
        $region41: #{_fused_gru_decoder.1} parent=11 // pred_check
          %p402 = pneg %p241
        $region42: #{_fused_gru_decoder.1} parent=11 // pred_check_branch
          %404 = sbr.rel (%p402) target = $region44
        $region43: #{_fused_gru_decoder.1} parent=11 // pred_region
          _
        $region44: #{_fused_gru_decoder.1} parent=11 // pred_fallthru
          _
        // Predicated region
        $region45: #{_fused_gru_decoder.1} parent=11 // pred_check
          %p405 = pneg %p262
        $region46: #{_fused_gru_decoder.1} parent=11 // pred_check_branch
          %407 = sbr.rel (%p405) target = $region48
        $region47: #{_fused_gru_decoder.1} parent=11 // pred_region
          _
        $region48: #{_fused_gru_decoder.1} parent=11 // pred_fallthru
          _
      $region12: #{_fused_gru_decoder.1} parent=5 // pred_fallthru
        _
      %p408 = scmp.lt.s32.totalorder %s28, 4
      // Predicated region
      $region49: #{_fused_gru_decoder.1} parent=5 // pred_check
        %p409 = pneg %p408
      $region50: #{_fused_gru_decoder.1} parent=5 // pred_check_branch
        %411 = sbr.rel (%p409) target = $region52
      $region51: #{_fused_gru_decoder.1} parent=5 // pred_region
        // Predicated region
        $region53: #{_fused_gru_decoder.1} parent=51 // pred_check
          %p412 = pneg %p62
        $region54: #{_fused_gru_decoder.1} parent=51 // pred_check_branch
          %414 = sbr.rel (%p412) target = $region56
        $region55: #{_fused_gru_decoder.1} parent=51 // pred_region
          %s415 = sand.u32 %s52, 1
          %s416 = scalar_lea.sflag [#allocation5], %s415
          %s417 = sand.u32 %s52, 1
          %s418 = smul.addr %s417, 4
          %s419 = scalar_lea.vmem [#allocation4], %s418
          %s421 = ssub.s32 64, 64
          %422 = vsyncadd %s416, %s421
          %s423 = sadd.s32 %s35, %s36
          %s424 = smul.addr %s423, 64
          %s425 = scalar_lea.hbm %s0, %s424
          %s427 = sshll.u32 %s419, 4
          %s428 = int_to_ptr.vmem [resolvable:$true] %s427
          %430 = dma.hbm_to_vmem [thread:$0]  %s425, 64, %s428, %s416
        $region56: #{_fused_gru_decoder.1} parent=51 // pred_fallthru
          _
      $region52: #{_fused_gru_decoder.1} parent=5 // pred_fallthru
        _
      %p431 = scmp.le.s32.totalorder 1, %s28
      %p432 = scmp.lt.s32.totalorder %s28, 5
      %p433 = pnand %p431, %p432
      %p434 = pneg %p433
      // Predicated region
      $region57: #{_fused_gru_decoder.1} parent=5 // pred_check
        _
      $region58: #{_fused_gru_decoder.1} parent=5 // pred_check_branch
        %436 = sbr.rel (%p433) target = $region60
      $region59: #{_fused_gru_decoder.1} parent=5 // pred_region
        %s437 = ssub.s32 %s28, 1
        %s438 = sand.u32 %s55, 1
        %s439 = scalar_lea.sflag [#allocation5], %s438
        %s440 = sand.u32 %s55, 1
        %s441 = smul.addr %s440, 4
        %s442 = scalar_lea.vmem [#allocation4], %s441
        // Predicated region
        $region61: #{_fused_gru_decoder.1} parent=59 // pred_check
          %p443 = pneg %p68
        $region62: #{_fused_gru_decoder.1} parent=59 // pred_check_branch
          %445 = sbr.rel (%p443) target = $region64
        $region63: #{_fused_gru_decoder.1} parent=59 // pred_region
          %446 = dma.done %s439, 64
        $region64: #{_fused_gru_decoder.1} parent=59 // pred_fallthru
          _
        // Predicated region
        $region65: #{_fused_gru_decoder.1} parent=59 // pred_check
          %p447 = pneg %p94
        $region66: #{_fused_gru_decoder.1} parent=59 // pred_check_branch
          %449 = sbr.rel (%p447) target = $region68
        $region67: #{_fused_gru_decoder.1} parent=59 // pred_region
          %450 = dma.done [#allocation8], 256
        $region68: #{_fused_gru_decoder.1} parent=59 // pred_fallthru
          _
        // Predicated region
        $region69: #{_fused_gru_decoder.1} parent=59 // pred_check
          %p451 = pneg %p115
        $region70: #{_fused_gru_decoder.1} parent=59 // pred_check_branch
          %453 = sbr.rel (%p451) target = $region72
        $region71: #{_fused_gru_decoder.1} parent=59 // pred_region
          %454 = dma.done [#allocation8], 6144
        $region72: #{_fused_gru_decoder.1} parent=59 // pred_fallthru
          _
        // Predicated region
        $region73: #{_fused_gru_decoder.1} parent=59 // pred_check
          %p455 = pneg %p136
        $region74: #{_fused_gru_decoder.1} parent=59 // pred_check_branch
          %457 = sbr.rel (%p455) target = $region76
        $region75: #{_fused_gru_decoder.1} parent=59 // pred_region
          %458 = dma.done [#allocation11], 6144
        $region76: #{_fused_gru_decoder.1} parent=59 // pred_fallthru
          _
        // Predicated region
        $region77: #{_fused_gru_decoder.1} parent=59 // pred_check
          %p459 = pneg %p178
        $region78: #{_fused_gru_decoder.1} parent=59 // pred_check_branch
          %461 = sbr.rel (%p459) target = $region80
        $region79: #{_fused_gru_decoder.1} parent=59 // pred_region
          %462 = dma.done [#allocation11], 96
        $region80: #{_fused_gru_decoder.1} parent=59 // pred_fallthru
          _
        // Predicated region
        $region81: #{_fused_gru_decoder.1} parent=59 // pred_check
          %p463 = pneg %p199
        $region82: #{_fused_gru_decoder.1} parent=59 // pred_check_branch
          %465 = sbr.rel (%p463) target = $region84
        $region83: #{_fused_gru_decoder.1} parent=59 // pred_region
          %466 = dma.done [#allocation14], 1024
        $region84: #{_fused_gru_decoder.1} parent=59 // pred_fallthru
          _
        %s467 = sand.u32 %s55, 1
        %s468 = scalar_lea.sflag [#allocation5], %s467
        %s469 = sand.u32 %s55, 1
        %s470 = smul.addr %s469, 4
        %s471 = scalar_lea.vmem [#allocation4], %s470
        %p472 = pneg %p68
        %p473 = pneg %p65
        %p474 = pneg %p94
        %p475 = pneg %p91
        %p476 = pneg %p115
        %p477 = pneg %p112
        %p478 = pneg %p136
        %p479 = pneg %p133
        %p480 = pneg %p157
        %p481 = pneg %p154
        %p482 = pneg %p178
        %p483 = pneg %p175
        %p484 = pneg %p199
        %p485 = pneg %p196
        %p486 = pneg %p220
        %p487 = pneg %p217
        %p488 = pneg %p241
        %p489 = pneg %p238
        %p490 = pneg %p262
        %p491 = pneg %p259
        %p492 = pneg %p288
        %p493 = pneg %p285
        %p494 = pneg %p314
        %p495 = pneg %p311
        %p497 = scmp.eq.s32.totalorder %s38, 0
        // Predicated region
        $region85: #{_fused_gru_decoder.1} parent=59 // pred_check
          %p498 = pneg %p497
        $region86: #{_fused_gru_decoder.1} parent=59 // pred_check_branch
          %500 = sbr.rel (%p498) target = $region88
        $region87: #{_fused_gru_decoder.1} parent=59 // pred_region
          %v501 = vld [vmem:[#allocation7] sm:$0xff]
          %v502 = vld [vmem:[#allocation7 + $0x8] sm:$0xff]
          %503 = vst [vmem:[#allocation2] sm:$0xff] %v501
          %504 = vst [vmem:[#allocation2 + $0x8] sm:$0xff] %v502
        $region88: #{_fused_gru_decoder.1} parent=59 // pred_fallthru
          _
        %v505 = vld [vmem:[%s442] sm:$0xf]
        %v506 = vld [vmem:[#allocation2] sm:$0xff]
        %v507 = vld [vmem:[#allocation9] sm:$0xff]
        %v508 = vld [vmem:[#allocation9 + $0x8] sm:$0xf]
        %v509 = vld [vmem:[#allocation9 + $0xc] sm:$0xff]
        %v510 = vld [vmem:[#allocation9 + $0x14] sm:$0xf]
        %v511 = vld [vmem:[#allocation9 + $0x18] sm:$0xff]
        %v512 = vld [vmem:[#allocation9 + $0x20] sm:$0xf]
        %v513 = vld [vmem:[#allocation9 + $0x24] sm:$0xff]
        %v514 = vld [vmem:[#allocation9 + $0x2c] sm:$0xf]
        %v515 = vld [vmem:[#allocation9 + $0x30] sm:$0xff]
        %v516 = vld [vmem:[#allocation9 + $0x38] sm:$0xf]
        %v517 = vld [vmem:[#allocation9 + $0x3c] sm:$0xff]
        %v518 = vld [vmem:[#allocation9 + $0x44] sm:$0xf]
        %v519 = vld [vmem:[#allocation9 + $0x48] sm:$0xff]
        %v520 = vld [vmem:[#allocation9 + $0x50] sm:$0xf]
        %v521 = vld [vmem:[#allocation9 + $0x54] sm:$0xff]
        %v522 = vld [vmem:[#allocation9 + $0x5c] sm:$0xf]
        %v523 = vld [vmem:[#allocation9 + $0x60] sm:$0xff]
        %v524 = vld [vmem:[#allocation9 + $0x68] sm:$0xf]
        %v525 = vld [vmem:[#allocation9 + $0x6c] sm:$0xff]
        %v526 = vld [vmem:[#allocation9 + $0x74] sm:$0xf]
        %v527 = vld [vmem:[#allocation9 + $0x78] sm:$0xff]
        %v528 = vld [vmem:[#allocation9 + $0x80] sm:$0xf]
        %v529 = vld [vmem:[#allocation9 + $0x84] sm:$0xff]
        %v530 = vld [vmem:[#allocation9 + $0x8c] sm:$0xf]
        %v531 = vld [vmem:[#allocation9 + $0x90] sm:$0xff]
        %v532 = vld [vmem:[#allocation9 + $0x98] sm:$0xf]
        %v533 = vld [vmem:[#allocation9 + $0x9c] sm:$0xff]
        %v534 = vld [vmem:[#allocation9 + $0xa4] sm:$0xf]
        %v535 = vld [vmem:[#allocation9 + $0xa8] sm:$0xff]
        %v536 = vld [vmem:[#allocation9 + $0xb0] sm:$0xf]
        %v537 = vld [vmem:[#allocation9 + $0xb4] sm:$0xff]
        %v538 = vld [vmem:[#allocation9 + $0xbc] sm:$0xf]
        %v539 = vld [vmem:[%s4] sm:$0x7]
        %v541 = vlaneseq
        %v542 = vshrl.u32 %v541, 7
        %v543 = vsub.s32 0, %v542
        %v544 = vrot.slane %v539, %v543
        %v545 = vlaneseq
        %v546 = vshrl.u32 %v545, 7
        %v547 = vsub.s32 1, %v546
        %v548 = vrot.slane %v539, %v547
        %v549 = vlaneseq
        %v550 = vshrl.u32 %v549, 7
        %v551 = vsub.s32 2, %v550
        %v552 = vrot.slane %v539, %v551
        %v588 = vunpack.c.l.b16 %v507
        %v589 = vunpack.c.h.b16 %v507
        %v590 = vunpack.c.l.b16 %v508
        %v591 = vunpack.c.l.b16 %v509
        %v592 = vunpack.c.h.b16 %v509
        %v593 = vunpack.c.l.b16 %v510
        %v594 = vunpack.c.l.b16 %v511
        %v595 = vunpack.c.h.b16 %v511
        %v596 = vunpack.c.l.b16 %v512
        %v597 = vunpack.c.l.b16 %v513
        %v598 = vunpack.c.h.b16 %v513
        %v599 = vunpack.c.l.b16 %v514
        %v600 = vunpack.c.l.b16 %v515
        %v601 = vunpack.c.h.b16 %v515
        %v602 = vunpack.c.l.b16 %v516
        %v603 = vunpack.c.l.b16 %v517
        %v604 = vunpack.c.h.b16 %v517
        %v605 = vunpack.c.l.b16 %v518
        %v606 = vunpack.c.l.b16 %v519
        %v607 = vunpack.c.h.b16 %v519
        %v608 = vunpack.c.l.b16 %v520
        %v609 = vunpack.c.l.b16 %v521
        %v610 = vunpack.c.h.b16 %v521
        %v611 = vunpack.c.l.b16 %v522
        %v612 = vunpack.c.l.b16 %v523
        %v613 = vunpack.c.h.b16 %v523
        %v614 = vunpack.c.l.b16 %v524
        %v615 = vunpack.c.l.b16 %v525
        %v616 = vunpack.c.h.b16 %v525
        %v617 = vunpack.c.l.b16 %v526
        %v618 = vunpack.c.l.b16 %v527
        %v619 = vunpack.c.h.b16 %v527
        %v620 = vunpack.c.l.b16 %v528
        %v621 = vunpack.c.l.b16 %v529
        %v622 = vunpack.c.h.b16 %v529
        %v623 = vunpack.c.l.b16 %v530
        %v624 = vunpack.c.l.b16 %v531
        %v625 = vunpack.c.h.b16 %v531
        %v626 = vunpack.c.l.b16 %v532
        %v627 = vunpack.c.l.b16 %v533
        %v628 = vunpack.c.h.b16 %v533
        %v629 = vunpack.c.l.b16 %v534
        %v630 = vunpack.c.l.b16 %v535
        %v631 = vunpack.c.h.b16 %v535
        %v632 = vunpack.c.l.b16 %v536
        %v633 = vunpack.c.l.b16 %v537
        %v634 = vunpack.c.h.b16 %v537
        %v635 = vunpack.c.l.b16 %v538
        %v636 = vpack.c.b16 %v591, %v588
        %v637 = vpack.c.b16 %v592, %v589
        %v638 = vpack.c.b16 %v593, %v590
        %v639 = vpack.c.b16 %v597, %v594
        %v640 = vpack.c.b16 %v598, %v595
        %v641 = vpack.c.b16 %v599, %v596
        %v642 = vpack.c.b16 %v603, %v600
        %v643 = vpack.c.b16 %v604, %v601
        %v644 = vpack.c.b16 %v605, %v602
        %v645 = vpack.c.b16 %v609, %v606
        %v646 = vpack.c.b16 %v610, %v607
        %v647 = vpack.c.b16 %v611, %v608
        %v648 = vpack.c.b16 %v615, %v612
        %v649 = vpack.c.b16 %v616, %v613
        %v650 = vpack.c.b16 %v617, %v614
        %v651 = vpack.c.b16 %v621, %v618
        %v652 = vpack.c.b16 %v622, %v619
        %v653 = vpack.c.b16 %v623, %v620
        %v654 = vpack.c.b16 %v627, %v624
        %v655 = vpack.c.b16 %v628, %v625
        %v656 = vpack.c.b16 %v629, %v626
        %v657 = vpack.c.b16 %v633, %v630
        %v658 = vpack.c.b16 %v634, %v631
        %v659 = vpack.c.b16 %v635, %v632
        %684 = vmatprep.subr.bf16.mxu0 %v658
        %685 = vmatpush1.bf16.msra.mxu0 %v657
        %686 = vmatprep.subr.bf16.mxu0 %v655
        %687 = vmatpush1.bf16.msra.mxu0 %v654
        %688 = vmatprep.subr.bf16.mxu0 %v652
        %689 = vmatpush1.bf16.msra.mxu0 %v651
        %690 = vmatprep.subr.bf16.mxu0 %v649
        %691 = vmatpush1.bf16.msra.mxu0 %v648
        %692 = vmatprep.subr.bf16.mxu0 %v646
        %693 = vmatpush1.bf16.msra.mxu0 %v645
        %694 = vmatprep.subr.bf16.mxu0 %v643
        %695 = vmatpush1.bf16.msra.mxu0 %v642
        %696 = vmatprep.subr.bf16.mxu0 %v640
        %697 = vmatpush1.bf16.msra.mxu0 %v639
        %698 = vmatprep.subr.bf16.mxu0 %v637
        %699 = vmatpush1.bf16.msra.mxu0 %v636
        %700 = vmatprep.subr.bf16.mxu0 0
        %701 = vmatpush2.bf16.msra.mxu0 0
        %702 = vmatprep.subr.bf16.mxu0 0
        %703 = vmatpush2.bf16.msra.mxu0 0
        %704 = vmatprep.subr.bf16.mxu0 0
        %705 = vmatpush2.bf16.msra.mxu0 0
        %706 = vmatprep.subr.bf16.mxu0 0
        %707 = vmatpush2.bf16.msra.mxu0 0
        %708 = vmatprep.subr.bf16.mxu0 0
        %709 = vmatpush2.bf16.msra.mxu0 0
        %710 = vmatprep.subr.bf16.mxu0 0
        %711 = vmatpush2.bf16.msra.mxu0 0
        %712 = vmatprep.subr.bf16.mxu0 0
        %713 = vmatpush2.bf16.msra.mxu0 0
        %714 = vmatprep.subr.bf16.mxu0 0
        %715 = vmatpush2.bf16.msra.mxu0 0
        %716 = vmatprep.mubr.bf16.mxu0 0
        %717 = vmatmul.mubr.bf16.gmra.mxu0 %v505
        %v718 = vpop.f32.mrf.mxu0
        %v719 = vadd.f32 %v544, %v718
        %v720 = vpop.f32.mrf.mxu0
        %v721 = vadd.f32 %v548, %v720
        %v722 = vpop.f32.mrf.mxu0
        %v723 = vpop.f32.mrf.mxu0
        %724 = vdwg.mxu0
        %725 = vmatprep.subr.bf16.mxu0 0
        %726 = vmatpush1.bf16.msra.mxu0 %v659
        %727 = vmatprep.subr.bf16.mxu0 0
        %728 = vmatpush1.bf16.msra.mxu0 %v656
        %729 = vmatprep.subr.bf16.mxu0 0
        %730 = vmatpush1.bf16.msra.mxu0 %v653
        %731 = vmatprep.subr.bf16.mxu0 0
        %732 = vmatpush1.bf16.msra.mxu0 %v650
        %733 = vmatprep.subr.bf16.mxu0 0
        %734 = vmatpush1.bf16.msra.mxu0 %v647
        %735 = vmatprep.subr.bf16.mxu0 0
        %736 = vmatpush1.bf16.msra.mxu0 %v644
        %737 = vmatprep.subr.bf16.mxu0 0
        %738 = vmatpush1.bf16.msra.mxu0 %v641
        %739 = vmatprep.subr.bf16.mxu0 0
        %740 = vmatpush1.bf16.msra.mxu0 %v638
        %741 = vmatprep.subr.bf16.mxu0 0
        %742 = vmatpush2.bf16.msra.mxu0 0
        %743 = vmatprep.subr.bf16.mxu0 0
        %744 = vmatpush2.bf16.msra.mxu0 0
        %745 = vmatprep.subr.bf16.mxu0 0
        %746 = vmatpush2.bf16.msra.mxu0 0
        %747 = vmatprep.subr.bf16.mxu0 0
        %748 = vmatpush2.bf16.msra.mxu0 0
        %749 = vmatprep.subr.bf16.mxu0 0
        %750 = vmatpush2.bf16.msra.mxu0 0
        %751 = vmatprep.subr.bf16.mxu0 0
        %752 = vmatpush2.bf16.msra.mxu0 0
        %753 = vmatprep.subr.bf16.mxu0 0
        %754 = vmatpush2.bf16.msra.mxu0 0
        %755 = vmatprep.subr.bf16.mxu0 0
        %756 = vmatpush2.bf16.msra.mxu0 0
        %757 = vmatprep.mubr.bf16.mxu0 0
        %758 = vmatmul.mubr.bf16.gmra.mxu0 %v505
        %v759 = vpop.f32.mrf.mxu0
        %v760 = vadd.f32 %v552, %v759
        %v761 = vpop.f32.mrf.mxu0
        %v762 = vpop.f32.mrf.mxu0
        %v763 = vpop.f32.mrf.mxu0
        %764 = vdwg.mxu0
        %v765 = vpack.c.bf16 %v506, %v506
        %v766 = vld [vmem:[#allocation10] sm:$0xff]
        %v767 = vld [vmem:[#allocation10 + $0x8] sm:$0xf]
        %v768 = vld [vmem:[#allocation10 + $0xc] sm:$0xff]
        %v769 = vld [vmem:[#allocation10 + $0x14] sm:$0xf]
        %v770 = vld [vmem:[#allocation10 + $0x18] sm:$0xff]
        %v771 = vld [vmem:[#allocation10 + $0x20] sm:$0xf]
        %v772 = vld [vmem:[#allocation10 + $0x24] sm:$0xff]
        %v773 = vld [vmem:[#allocation10 + $0x2c] sm:$0xf]
        %v774 = vld [vmem:[#allocation10 + $0x30] sm:$0xff]
        %v775 = vld [vmem:[#allocation10 + $0x38] sm:$0xf]
        %v776 = vld [vmem:[#allocation10 + $0x3c] sm:$0xff]
        %v777 = vld [vmem:[#allocation10 + $0x44] sm:$0xf]
        %v778 = vld [vmem:[#allocation10 + $0x48] sm:$0xff]
        %v779 = vld [vmem:[#allocation10 + $0x50] sm:$0xf]
        %v780 = vld [vmem:[#allocation10 + $0x54] sm:$0xff]
        %v781 = vld [vmem:[#allocation10 + $0x5c] sm:$0xf]
        %v782 = vld [vmem:[#allocation10 + $0x60] sm:$0xff]
        %v783 = vld [vmem:[#allocation10 + $0x68] sm:$0xf]
        %v784 = vld [vmem:[#allocation10 + $0x6c] sm:$0xff]
        %v785 = vld [vmem:[#allocation10 + $0x74] sm:$0xf]
        %v786 = vld [vmem:[#allocation10 + $0x78] sm:$0xff]
        %v787 = vld [vmem:[#allocation10 + $0x80] sm:$0xf]
        %v788 = vld [vmem:[#allocation10 + $0x84] sm:$0xff]
        %v789 = vld [vmem:[#allocation10 + $0x8c] sm:$0xf]
        %v790 = vld [vmem:[#allocation10 + $0x90] sm:$0xff]
        %v791 = vld [vmem:[#allocation10 + $0x98] sm:$0xf]
        %v792 = vld [vmem:[#allocation10 + $0x9c] sm:$0xff]
        %v793 = vld [vmem:[#allocation10 + $0xa4] sm:$0xf]
        %v794 = vld [vmem:[#allocation10 + $0xa8] sm:$0xff]
        %v795 = vld [vmem:[#allocation10 + $0xb0] sm:$0xf]
        %v796 = vld [vmem:[#allocation10 + $0xb4] sm:$0xff]
        %v797 = vld [vmem:[#allocation10 + $0xbc] sm:$0xf]
        %v798 = vld [vmem:[#allocation12] sm:$0x7]
        %v800 = vlaneseq
        %v801 = vshrl.u32 %v800, 7
        %v802 = vsub.s32 0, %v801
        %v803 = vrot.slane %v798, %v802
        %v804 = vlaneseq
        %v805 = vshrl.u32 %v804, 7
        %v806 = vsub.s32 1, %v805
        %v807 = vrot.slane %v798, %v806
        %v808 = vlaneseq
        %v809 = vshrl.u32 %v808, 7
        %v810 = vsub.s32 2, %v809
        %v811 = vrot.slane %v798, %v810
        %v847 = vunpack.c.l.b16 %v766
        %v848 = vunpack.c.h.b16 %v766
        %v849 = vunpack.c.l.b16 %v767
        %v850 = vunpack.c.l.b16 %v768
        %v851 = vunpack.c.h.b16 %v768
        %v852 = vunpack.c.l.b16 %v769
        %v853 = vunpack.c.l.b16 %v770
        %v854 = vunpack.c.h.b16 %v770
        %v855 = vunpack.c.l.b16 %v771
        %v856 = vunpack.c.l.b16 %v772
        %v857 = vunpack.c.h.b16 %v772
        %v858 = vunpack.c.l.b16 %v773
        %v859 = vunpack.c.l.b16 %v774
        %v860 = vunpack.c.h.b16 %v774
        %v861 = vunpack.c.l.b16 %v775
        %v862 = vunpack.c.l.b16 %v776
        %v863 = vunpack.c.h.b16 %v776
        %v864 = vunpack.c.l.b16 %v777
        %v865 = vunpack.c.l.b16 %v778
        %v866 = vunpack.c.h.b16 %v778
        %v867 = vunpack.c.l.b16 %v779
        %v868 = vunpack.c.l.b16 %v780
        %v869 = vunpack.c.h.b16 %v780
        %v870 = vunpack.c.l.b16 %v781
        %v871 = vunpack.c.l.b16 %v782
        %v872 = vunpack.c.h.b16 %v782
        %v873 = vunpack.c.l.b16 %v783
        %v874 = vunpack.c.l.b16 %v784
        %v875 = vunpack.c.h.b16 %v784
        %v876 = vunpack.c.l.b16 %v785
        %v877 = vunpack.c.l.b16 %v786
        %v878 = vunpack.c.h.b16 %v786
        %v879 = vunpack.c.l.b16 %v787
        %v880 = vunpack.c.l.b16 %v788
        %v881 = vunpack.c.h.b16 %v788
        %v882 = vunpack.c.l.b16 %v789
        %v883 = vunpack.c.l.b16 %v790
        %v884 = vunpack.c.h.b16 %v790
        %v885 = vunpack.c.l.b16 %v791
        %v886 = vunpack.c.l.b16 %v792
        %v887 = vunpack.c.h.b16 %v792
        %v888 = vunpack.c.l.b16 %v793
        %v889 = vunpack.c.l.b16 %v794
        %v890 = vunpack.c.h.b16 %v794
        %v891 = vunpack.c.l.b16 %v795
        %v892 = vunpack.c.l.b16 %v796
        %v893 = vunpack.c.h.b16 %v796
        %v894 = vunpack.c.l.b16 %v797
        %v895 = vpack.c.b16 %v850, %v847
        %v896 = vpack.c.b16 %v851, %v848
        %v897 = vpack.c.b16 %v852, %v849
        %v898 = vpack.c.b16 %v856, %v853
        %v899 = vpack.c.b16 %v857, %v854
        %v900 = vpack.c.b16 %v858, %v855
        %v901 = vpack.c.b16 %v862, %v859
        %v902 = vpack.c.b16 %v863, %v860
        %v903 = vpack.c.b16 %v864, %v861
        %v904 = vpack.c.b16 %v868, %v865
        %v905 = vpack.c.b16 %v869, %v866
        %v906 = vpack.c.b16 %v870, %v867
        %v907 = vpack.c.b16 %v874, %v871
        %v908 = vpack.c.b16 %v875, %v872
        %v909 = vpack.c.b16 %v876, %v873
        %v910 = vpack.c.b16 %v880, %v877
        %v911 = vpack.c.b16 %v881, %v878
        %v912 = vpack.c.b16 %v882, %v879
        %v913 = vpack.c.b16 %v886, %v883
        %v914 = vpack.c.b16 %v887, %v884
        %v915 = vpack.c.b16 %v888, %v885
        %v916 = vpack.c.b16 %v892, %v889
        %v917 = vpack.c.b16 %v893, %v890
        %v918 = vpack.c.b16 %v894, %v891
        %943 = vmatprep.subr.bf16.mxu0 %v917
        %944 = vmatpush1.bf16.msra.mxu0 %v916
        %945 = vmatprep.subr.bf16.mxu0 %v914
        %946 = vmatpush1.bf16.msra.mxu0 %v913
        %947 = vmatprep.subr.bf16.mxu0 %v911
        %948 = vmatpush1.bf16.msra.mxu0 %v910
        %949 = vmatprep.subr.bf16.mxu0 %v908
        %950 = vmatpush1.bf16.msra.mxu0 %v907
        %951 = vmatprep.subr.bf16.mxu0 %v905
        %952 = vmatpush1.bf16.msra.mxu0 %v904
        %953 = vmatprep.subr.bf16.mxu0 %v902
        %954 = vmatpush1.bf16.msra.mxu0 %v901
        %955 = vmatprep.subr.bf16.mxu0 %v899
        %956 = vmatpush1.bf16.msra.mxu0 %v898
        %957 = vmatprep.subr.bf16.mxu0 %v896
        %958 = vmatpush1.bf16.msra.mxu0 %v895
        %959 = vmatprep.subr.bf16.mxu0 0
        %960 = vmatpush2.bf16.msra.mxu0 0
        %961 = vmatprep.subr.bf16.mxu0 0
        %962 = vmatpush2.bf16.msra.mxu0 0
        %963 = vmatprep.subr.bf16.mxu0 0
        %964 = vmatpush2.bf16.msra.mxu0 0
        %965 = vmatprep.subr.bf16.mxu0 0
        %966 = vmatpush2.bf16.msra.mxu0 0
        %967 = vmatprep.subr.bf16.mxu0 0
        %968 = vmatpush2.bf16.msra.mxu0 0
        %969 = vmatprep.subr.bf16.mxu0 0
        %970 = vmatpush2.bf16.msra.mxu0 0
        %971 = vmatprep.subr.bf16.mxu0 0
        %972 = vmatpush2.bf16.msra.mxu0 0
        %973 = vmatprep.subr.bf16.mxu0 0
        %974 = vmatpush2.bf16.msra.mxu0 0
        %975 = vmatprep.mubr.bf16.mxu0 0
        %976 = vmatmul.mubr.bf16.gmra.mxu0 %v765
        %v977 = vpop.f32.mrf.mxu0
        %v978 = vadd.f32 %v803, %v977
        %v979 = vpop.f32.mrf.mxu0
        %v980 = vadd.f32 %v807, %v979
        %v981 = vpop.f32.mrf.mxu0
        %v982 = vpop.f32.mrf.mxu0
        %983 = vdwg.mxu0
        %984 = vmatprep.subr.bf16.mxu0 0
        %985 = vmatpush1.bf16.msra.mxu0 %v918
        %986 = vmatprep.subr.bf16.mxu0 0
        %987 = vmatpush1.bf16.msra.mxu0 %v915
        %988 = vmatprep.subr.bf16.mxu0 0
        %989 = vmatpush1.bf16.msra.mxu0 %v912
        %990 = vmatprep.subr.bf16.mxu0 0
        %991 = vmatpush1.bf16.msra.mxu0 %v909
        %992 = vmatprep.subr.bf16.mxu0 0
        %993 = vmatpush1.bf16.msra.mxu0 %v906
        %994 = vmatprep.subr.bf16.mxu0 0
        %995 = vmatpush1.bf16.msra.mxu0 %v903
        %996 = vmatprep.subr.bf16.mxu0 0
        %997 = vmatpush1.bf16.msra.mxu0 %v900
        %998 = vmatprep.subr.bf16.mxu0 0
        %999 = vmatpush1.bf16.msra.mxu0 %v897
        %1000 = vmatprep.subr.bf16.mxu0 0
        %1001 = vmatpush2.bf16.msra.mxu0 0
        %1002 = vmatprep.subr.bf16.mxu0 0
        %1003 = vmatpush2.bf16.msra.mxu0 0
        %1004 = vmatprep.subr.bf16.mxu0 0
        %1005 = vmatpush2.bf16.msra.mxu0 0
        %1006 = vmatprep.subr.bf16.mxu0 0
        %1007 = vmatpush2.bf16.msra.mxu0 0
        %1008 = vmatprep.subr.bf16.mxu0 0
        %1009 = vmatpush2.bf16.msra.mxu0 0
        %1010 = vmatprep.subr.bf16.mxu0 0
        %1011 = vmatpush2.bf16.msra.mxu0 0
        %1012 = vmatprep.subr.bf16.mxu0 0
        %1013 = vmatpush2.bf16.msra.mxu0 0
        %1014 = vmatprep.subr.bf16.mxu0 0
        %1015 = vmatpush2.bf16.msra.mxu0 0
        %1016 = vmatprep.mubr.bf16.mxu0 0
        %1017 = vmatmul.mubr.bf16.gmra.mxu0 %v765
        %v1018 = vpop.f32.mrf.mxu0
        %v1019 = vadd.f32 %v811, %v1018
        %v1020 = vpop.f32.mrf.mxu0
        %v1021 = vpop.f32.mrf.mxu0
        %v1022 = vpop.f32.mrf.mxu0
        %1023 = vdwg.mxu0
        %v1024 = vadd.f32 %v719, %v978
        %v1025 = vxor.u32 %v1024, 2147483648
        %v1026 = vmul.f32 %v1025, 1.442695
        %v1027 = vpow.pop %v1026
        %v1028 = vadd.f32 %v1027, 1.0
        %v1029 = vrcp.pop %v1028
        %v1030 = vmul.f32 1.0, %v1029
        %v1031 = vadd.f32 %v721, %v980
        %v1032 = vxor.u32 %v1031, 2147483648
        %v1033 = vmul.f32 %v1032, 1.442695
        %v1034 = vpow.pop %v1033
        %v1035 = vadd.f32 %v1034, 1.0
        %v1036 = vrcp.pop %v1035
        %v1037 = vmul.f32 1.0, %v1036
        %v1038 = vmul.f32 %v1030, %v1019
        %v1039 = vadd.f32 %v760, %v1038
        %v1040 = vtanh.pop %v1039
        %v1041 = vsub.f32 1.0, %v1037
        %v1042 = vmul.f32 %v1041, %v1040
        %v1043 = vmul.f32 %v1037, %v506
        %v1044 = vadd.f32 %v1042, %v1043
        %1045 = vst [vmem:[#allocation2] sm:$0xff] %v1044
        %v1046 = vpack.c.bf16 %v1044, %v1044
        %s1047 = scalar_lea.vmem [#allocation2], 8
        %v1048 = vld [vmem:[%s1047] sm:$0xff]
        %s1049 = scalar_lea.vmem [#allocation9], 192
        %v1050 = vld [vmem:[%s1049] sm:$0xff]
        %v1051 = vld [vmem:[%s1049 + $0x8] sm:$0xf]
        %v1052 = vld [vmem:[%s1049 + $0xc] sm:$0xff]
        %v1053 = vld [vmem:[%s1049 + $0x14] sm:$0xf]
        %v1054 = vld [vmem:[%s1049 + $0x18] sm:$0xff]
        %v1055 = vld [vmem:[%s1049 + $0x20] sm:$0xf]
        %v1056 = vld [vmem:[%s1049 + $0x24] sm:$0xff]
        %v1057 = vld [vmem:[%s1049 + $0x2c] sm:$0xf]
        %v1058 = vld [vmem:[%s1049 + $0x30] sm:$0xff]
        %v1059 = vld [vmem:[%s1049 + $0x38] sm:$0xf]
        %v1060 = vld [vmem:[%s1049 + $0x3c] sm:$0xff]
        %v1061 = vld [vmem:[%s1049 + $0x44] sm:$0xf]
        %v1062 = vld [vmem:[%s1049 + $0x48] sm:$0xff]
        %v1063 = vld [vmem:[%s1049 + $0x50] sm:$0xf]
        %v1064 = vld [vmem:[%s1049 + $0x54] sm:$0xff]
        %v1065 = vld [vmem:[%s1049 + $0x5c] sm:$0xf]
        %v1066 = vld [vmem:[%s1049 + $0x60] sm:$0xff]
        %v1067 = vld [vmem:[%s1049 + $0x68] sm:$0xf]
        %v1068 = vld [vmem:[%s1049 + $0x6c] sm:$0xff]
        %v1069 = vld [vmem:[%s1049 + $0x74] sm:$0xf]
        %v1070 = vld [vmem:[%s1049 + $0x78] sm:$0xff]
        %v1071 = vld [vmem:[%s1049 + $0x80] sm:$0xf]
        %v1072 = vld [vmem:[%s1049 + $0x84] sm:$0xff]
        %v1073 = vld [vmem:[%s1049 + $0x8c] sm:$0xf]
        %v1074 = vld [vmem:[%s1049 + $0x90] sm:$0xff]
        %v1075 = vld [vmem:[%s1049 + $0x98] sm:$0xf]
        %v1076 = vld [vmem:[%s1049 + $0x9c] sm:$0xff]
        %v1077 = vld [vmem:[%s1049 + $0xa4] sm:$0xf]
        %v1078 = vld [vmem:[%s1049 + $0xa8] sm:$0xff]
        %v1079 = vld [vmem:[%s1049 + $0xb0] sm:$0xf]
        %v1080 = vld [vmem:[%s1049 + $0xb4] sm:$0xff]
        %v1081 = vld [vmem:[%s1049 + $0xbc] sm:$0xf]
        %s1082 = scalar_lea.vmem %s4, 3
        %v1083 = vld [vmem:[%s1082] sm:$0x7]
        %v1085 = vlaneseq
        %v1086 = vshrl.u32 %v1085, 7
        %v1087 = vsub.s32 0, %v1086
        %v1088 = vrot.slane %v1083, %v1087
        %v1089 = vlaneseq
        %v1090 = vshrl.u32 %v1089, 7
        %v1091 = vsub.s32 1, %v1090
        %v1092 = vrot.slane %v1083, %v1091
        %v1093 = vlaneseq
        %v1094 = vshrl.u32 %v1093, 7
        %v1095 = vsub.s32 2, %v1094
        %v1096 = vrot.slane %v1083, %v1095
        %v1132 = vunpack.c.l.b16 %v1050
        %v1133 = vunpack.c.h.b16 %v1050
        %v1134 = vunpack.c.l.b16 %v1051
        %v1135 = vunpack.c.l.b16 %v1052
        %v1136 = vunpack.c.h.b16 %v1052
        %v1137 = vunpack.c.l.b16 %v1053
        %v1138 = vunpack.c.l.b16 %v1054
        %v1139 = vunpack.c.h.b16 %v1054
        %v1140 = vunpack.c.l.b16 %v1055
        %v1141 = vunpack.c.l.b16 %v1056
        %v1142 = vunpack.c.h.b16 %v1056
        %v1143 = vunpack.c.l.b16 %v1057
        %v1144 = vunpack.c.l.b16 %v1058
        %v1145 = vunpack.c.h.b16 %v1058
        %v1146 = vunpack.c.l.b16 %v1059
        %v1147 = vunpack.c.l.b16 %v1060
        %v1148 = vunpack.c.h.b16 %v1060
        %v1149 = vunpack.c.l.b16 %v1061
        %v1150 = vunpack.c.l.b16 %v1062
        %v1151 = vunpack.c.h.b16 %v1062
        %v1152 = vunpack.c.l.b16 %v1063
        %v1153 = vunpack.c.l.b16 %v1064
        %v1154 = vunpack.c.h.b16 %v1064
        %v1155 = vunpack.c.l.b16 %v1065
        %v1156 = vunpack.c.l.b16 %v1066
        %v1157 = vunpack.c.h.b16 %v1066
        %v1158 = vunpack.c.l.b16 %v1067
        %v1159 = vunpack.c.l.b16 %v1068
        %v1160 = vunpack.c.h.b16 %v1068
        %v1161 = vunpack.c.l.b16 %v1069
        %v1162 = vunpack.c.l.b16 %v1070
        %v1163 = vunpack.c.h.b16 %v1070
        %v1164 = vunpack.c.l.b16 %v1071
        %v1165 = vunpack.c.l.b16 %v1072
        %v1166 = vunpack.c.h.b16 %v1072
        %v1167 = vunpack.c.l.b16 %v1073
        %v1168 = vunpack.c.l.b16 %v1074
        %v1169 = vunpack.c.h.b16 %v1074
        %v1170 = vunpack.c.l.b16 %v1075
        %v1171 = vunpack.c.l.b16 %v1076
        %v1172 = vunpack.c.h.b16 %v1076
        %v1173 = vunpack.c.l.b16 %v1077
        %v1174 = vunpack.c.l.b16 %v1078
        %v1175 = vunpack.c.h.b16 %v1078
        %v1176 = vunpack.c.l.b16 %v1079
        %v1177 = vunpack.c.l.b16 %v1080
        %v1178 = vunpack.c.h.b16 %v1080
        %v1179 = vunpack.c.l.b16 %v1081
        %v1180 = vpack.c.b16 %v1135, %v1132
        %v1181 = vpack.c.b16 %v1136, %v1133
        %v1182 = vpack.c.b16 %v1137, %v1134
        %v1183 = vpack.c.b16 %v1141, %v1138
        %v1184 = vpack.c.b16 %v1142, %v1139
        %v1185 = vpack.c.b16 %v1143, %v1140
        %v1186 = vpack.c.b16 %v1147, %v1144
        %v1187 = vpack.c.b16 %v1148, %v1145
        %v1188 = vpack.c.b16 %v1149, %v1146
        %v1189 = vpack.c.b16 %v1153, %v1150
        %v1190 = vpack.c.b16 %v1154, %v1151
        %v1191 = vpack.c.b16 %v1155, %v1152
        %v1192 = vpack.c.b16 %v1159, %v1156
        %v1193 = vpack.c.b16 %v1160, %v1157
        %v1194 = vpack.c.b16 %v1161, %v1158
        %v1195 = vpack.c.b16 %v1165, %v1162
        %v1196 = vpack.c.b16 %v1166, %v1163
        %v1197 = vpack.c.b16 %v1167, %v1164
        %v1198 = vpack.c.b16 %v1171, %v1168
        %v1199 = vpack.c.b16 %v1172, %v1169
        %v1200 = vpack.c.b16 %v1173, %v1170
        %v1201 = vpack.c.b16 %v1177, %v1174
        %v1202 = vpack.c.b16 %v1178, %v1175
        %v1203 = vpack.c.b16 %v1179, %v1176
        %1228 = vmatprep.subr.bf16.mxu0 %v1202
        %1229 = vmatpush1.bf16.msra.mxu0 %v1201
        %1230 = vmatprep.subr.bf16.mxu0 %v1199
        %1231 = vmatpush1.bf16.msra.mxu0 %v1198
        %1232 = vmatprep.subr.bf16.mxu0 %v1196
        %1233 = vmatpush1.bf16.msra.mxu0 %v1195
        %1234 = vmatprep.subr.bf16.mxu0 %v1193
        %1235 = vmatpush1.bf16.msra.mxu0 %v1192
        %1236 = vmatprep.subr.bf16.mxu0 %v1190
        %1237 = vmatpush1.bf16.msra.mxu0 %v1189
        %1238 = vmatprep.subr.bf16.mxu0 %v1187
        %1239 = vmatpush1.bf16.msra.mxu0 %v1186
        %1240 = vmatprep.subr.bf16.mxu0 %v1184
        %1241 = vmatpush1.bf16.msra.mxu0 %v1183
        %1242 = vmatprep.subr.bf16.mxu0 %v1181
        %1243 = vmatpush1.bf16.msra.mxu0 %v1180
        %1244 = vmatprep.subr.bf16.mxu0 0
        %1245 = vmatpush2.bf16.msra.mxu0 0
        %1246 = vmatprep.subr.bf16.mxu0 0
        %1247 = vmatpush2.bf16.msra.mxu0 0
        %1248 = vmatprep.subr.bf16.mxu0 0
        %1249 = vmatpush2.bf16.msra.mxu0 0
        %1250 = vmatprep.subr.bf16.mxu0 0
        %1251 = vmatpush2.bf16.msra.mxu0 0
        %1252 = vmatprep.subr.bf16.mxu0 0
        %1253 = vmatpush2.bf16.msra.mxu0 0
        %1254 = vmatprep.subr.bf16.mxu0 0
        %1255 = vmatpush2.bf16.msra.mxu0 0
        %1256 = vmatprep.subr.bf16.mxu0 0
        %1257 = vmatpush2.bf16.msra.mxu0 0
        %1258 = vmatprep.subr.bf16.mxu0 0
        %1259 = vmatpush2.bf16.msra.mxu0 0
        %1260 = vmatprep.mubr.bf16.mxu0 0
        %1261 = vmatmul.mubr.bf16.gmra.mxu0 %v1046
        %v1262 = vpop.f32.mrf.mxu0
        %v1263 = vadd.f32 %v1088, %v1262
        %v1264 = vpop.f32.mrf.mxu0
        %v1265 = vadd.f32 %v1092, %v1264
        %v1266 = vpop.f32.mrf.mxu0
        %v1267 = vpop.f32.mrf.mxu0
        %1268 = vdwg.mxu0
        %1269 = vmatprep.subr.bf16.mxu0 0
        %1270 = vmatpush1.bf16.msra.mxu0 %v1203
        %1271 = vmatprep.subr.bf16.mxu0 0
        %1272 = vmatpush1.bf16.msra.mxu0 %v1200
        %1273 = vmatprep.subr.bf16.mxu0 0
        %1274 = vmatpush1.bf16.msra.mxu0 %v1197
        %1275 = vmatprep.subr.bf16.mxu0 0
        %1276 = vmatpush1.bf16.msra.mxu0 %v1194
        %1277 = vmatprep.subr.bf16.mxu0 0
        %1278 = vmatpush1.bf16.msra.mxu0 %v1191
        %1279 = vmatprep.subr.bf16.mxu0 0
        %1280 = vmatpush1.bf16.msra.mxu0 %v1188
        %1281 = vmatprep.subr.bf16.mxu0 0
        %1282 = vmatpush1.bf16.msra.mxu0 %v1185
        %1283 = vmatprep.subr.bf16.mxu0 0
        %1284 = vmatpush1.bf16.msra.mxu0 %v1182
        %1285 = vmatprep.subr.bf16.mxu0 0
        %1286 = vmatpush2.bf16.msra.mxu0 0
        %1287 = vmatprep.subr.bf16.mxu0 0
        %1288 = vmatpush2.bf16.msra.mxu0 0
        %1289 = vmatprep.subr.bf16.mxu0 0
        %1290 = vmatpush2.bf16.msra.mxu0 0
        %1291 = vmatprep.subr.bf16.mxu0 0
        %1292 = vmatpush2.bf16.msra.mxu0 0
        %1293 = vmatprep.subr.bf16.mxu0 0
        %1294 = vmatpush2.bf16.msra.mxu0 0
        %1295 = vmatprep.subr.bf16.mxu0 0
        %1296 = vmatpush2.bf16.msra.mxu0 0
        %1297 = vmatprep.subr.bf16.mxu0 0
        %1298 = vmatpush2.bf16.msra.mxu0 0
        %1299 = vmatprep.subr.bf16.mxu0 0
        %1300 = vmatpush2.bf16.msra.mxu0 0
        %1301 = vmatprep.mubr.bf16.mxu0 0
        %1302 = vmatmul.mubr.bf16.gmra.mxu0 %v1046
        %v1303 = vpop.f32.mrf.mxu0
        %v1304 = vadd.f32 %v1096, %v1303
        %v1305 = vpop.f32.mrf.mxu0
        %v1306 = vpop.f32.mrf.mxu0
        %v1307 = vpop.f32.mrf.mxu0
        %1308 = vdwg.mxu0
        %v1309 = vpack.c.bf16 %v1048, %v1048
        %s1310 = scalar_lea.vmem [#allocation10], 192
        %v1311 = vld [vmem:[%s1310] sm:$0xff]
        %v1312 = vld [vmem:[%s1310 + $0x8] sm:$0xf]
        %v1313 = vld [vmem:[%s1310 + $0xc] sm:$0xff]
        %v1314 = vld [vmem:[%s1310 + $0x14] sm:$0xf]
        %v1315 = vld [vmem:[%s1310 + $0x18] sm:$0xff]
        %v1316 = vld [vmem:[%s1310 + $0x20] sm:$0xf]
        %v1317 = vld [vmem:[%s1310 + $0x24] sm:$0xff]
        %v1318 = vld [vmem:[%s1310 + $0x2c] sm:$0xf]
        %v1319 = vld [vmem:[%s1310 + $0x30] sm:$0xff]
        %v1320 = vld [vmem:[%s1310 + $0x38] sm:$0xf]
        %v1321 = vld [vmem:[%s1310 + $0x3c] sm:$0xff]
        %v1322 = vld [vmem:[%s1310 + $0x44] sm:$0xf]
        %v1323 = vld [vmem:[%s1310 + $0x48] sm:$0xff]
        %v1324 = vld [vmem:[%s1310 + $0x50] sm:$0xf]
        %v1325 = vld [vmem:[%s1310 + $0x54] sm:$0xff]
        %v1326 = vld [vmem:[%s1310 + $0x5c] sm:$0xf]
        %v1327 = vld [vmem:[%s1310 + $0x60] sm:$0xff]
        %v1328 = vld [vmem:[%s1310 + $0x68] sm:$0xf]
        %v1329 = vld [vmem:[%s1310 + $0x6c] sm:$0xff]
        %v1330 = vld [vmem:[%s1310 + $0x74] sm:$0xf]
        %v1331 = vld [vmem:[%s1310 + $0x78] sm:$0xff]
        %v1332 = vld [vmem:[%s1310 + $0x80] sm:$0xf]
        %v1333 = vld [vmem:[%s1310 + $0x84] sm:$0xff]
        %v1334 = vld [vmem:[%s1310 + $0x8c] sm:$0xf]
        %v1335 = vld [vmem:[%s1310 + $0x90] sm:$0xff]
        %v1336 = vld [vmem:[%s1310 + $0x98] sm:$0xf]
        %v1337 = vld [vmem:[%s1310 + $0x9c] sm:$0xff]
        %v1338 = vld [vmem:[%s1310 + $0xa4] sm:$0xf]
        %v1339 = vld [vmem:[%s1310 + $0xa8] sm:$0xff]
        %v1340 = vld [vmem:[%s1310 + $0xb0] sm:$0xf]
        %v1341 = vld [vmem:[%s1310 + $0xb4] sm:$0xff]
        %v1342 = vld [vmem:[%s1310 + $0xbc] sm:$0xf]
        %s1343 = scalar_lea.vmem [#allocation12], 3
        %v1344 = vld [vmem:[%s1343] sm:$0x7]
        %v1346 = vlaneseq
        %v1347 = vshrl.u32 %v1346, 7
        %v1348 = vsub.s32 0, %v1347
        %v1349 = vrot.slane %v1344, %v1348
        %v1350 = vlaneseq
        %v1351 = vshrl.u32 %v1350, 7
        %v1352 = vsub.s32 1, %v1351
        %v1353 = vrot.slane %v1344, %v1352
        %v1354 = vlaneseq
        %v1355 = vshrl.u32 %v1354, 7
        %v1356 = vsub.s32 2, %v1355
        %v1357 = vrot.slane %v1344, %v1356
        %v1393 = vunpack.c.l.b16 %v1311
        %v1394 = vunpack.c.h.b16 %v1311
        %v1395 = vunpack.c.l.b16 %v1312
        %v1396 = vunpack.c.l.b16 %v1313
        %v1397 = vunpack.c.h.b16 %v1313
        %v1398 = vunpack.c.l.b16 %v1314
        %v1399 = vunpack.c.l.b16 %v1315
        %v1400 = vunpack.c.h.b16 %v1315
        %v1401 = vunpack.c.l.b16 %v1316
        %v1402 = vunpack.c.l.b16 %v1317
        %v1403 = vunpack.c.h.b16 %v1317
        %v1404 = vunpack.c.l.b16 %v1318
        %v1405 = vunpack.c.l.b16 %v1319
        %v1406 = vunpack.c.h.b16 %v1319
        %v1407 = vunpack.c.l.b16 %v1320
        %v1408 = vunpack.c.l.b16 %v1321
        %v1409 = vunpack.c.h.b16 %v1321
        %v1410 = vunpack.c.l.b16 %v1322
        %v1411 = vunpack.c.l.b16 %v1323
        %v1412 = vunpack.c.h.b16 %v1323
        %v1413 = vunpack.c.l.b16 %v1324
        %v1414 = vunpack.c.l.b16 %v1325
        %v1415 = vunpack.c.h.b16 %v1325
        %v1416 = vunpack.c.l.b16 %v1326
        %v1417 = vunpack.c.l.b16 %v1327
        %v1418 = vunpack.c.h.b16 %v1327
        %v1419 = vunpack.c.l.b16 %v1328
        %v1420 = vunpack.c.l.b16 %v1329
        %v1421 = vunpack.c.h.b16 %v1329
        %v1422 = vunpack.c.l.b16 %v1330
        %v1423 = vunpack.c.l.b16 %v1331
        %v1424 = vunpack.c.h.b16 %v1331
        %v1425 = vunpack.c.l.b16 %v1332
        %v1426 = vunpack.c.l.b16 %v1333
        %v1427 = vunpack.c.h.b16 %v1333
        %v1428 = vunpack.c.l.b16 %v1334
        %v1429 = vunpack.c.l.b16 %v1335
        %v1430 = vunpack.c.h.b16 %v1335
        %v1431 = vunpack.c.l.b16 %v1336
        %v1432 = vunpack.c.l.b16 %v1337
        %v1433 = vunpack.c.h.b16 %v1337
        %v1434 = vunpack.c.l.b16 %v1338
        %v1435 = vunpack.c.l.b16 %v1339
        %v1436 = vunpack.c.h.b16 %v1339
        %v1437 = vunpack.c.l.b16 %v1340
        %v1438 = vunpack.c.l.b16 %v1341
        %v1439 = vunpack.c.h.b16 %v1341
        %v1440 = vunpack.c.l.b16 %v1342
        %v1441 = vpack.c.b16 %v1396, %v1393
        %v1442 = vpack.c.b16 %v1397, %v1394
        %v1443 = vpack.c.b16 %v1398, %v1395
        %v1444 = vpack.c.b16 %v1402, %v1399
        %v1445 = vpack.c.b16 %v1403, %v1400
        %v1446 = vpack.c.b16 %v1404, %v1401
        %v1447 = vpack.c.b16 %v1408, %v1405
        %v1448 = vpack.c.b16 %v1409, %v1406
        %v1449 = vpack.c.b16 %v1410, %v1407
        %v1450 = vpack.c.b16 %v1414, %v1411
        %v1451 = vpack.c.b16 %v1415, %v1412
        %v1452 = vpack.c.b16 %v1416, %v1413
        %v1453 = vpack.c.b16 %v1420, %v1417
        %v1454 = vpack.c.b16 %v1421, %v1418
        %v1455 = vpack.c.b16 %v1422, %v1419
        %v1456 = vpack.c.b16 %v1426, %v1423
        %v1457 = vpack.c.b16 %v1427, %v1424
        %v1458 = vpack.c.b16 %v1428, %v1425
        %v1459 = vpack.c.b16 %v1432, %v1429
        %v1460 = vpack.c.b16 %v1433, %v1430
        %v1461 = vpack.c.b16 %v1434, %v1431
        %v1462 = vpack.c.b16 %v1438, %v1435
        %v1463 = vpack.c.b16 %v1439, %v1436
        %v1464 = vpack.c.b16 %v1440, %v1437
        %1489 = vmatprep.subr.bf16.mxu0 %v1463
        %1490 = vmatpush1.bf16.msra.mxu0 %v1462
        %1491 = vmatprep.subr.bf16.mxu0 %v1460
        %1492 = vmatpush1.bf16.msra.mxu0 %v1459
        %1493 = vmatprep.subr.bf16.mxu0 %v1457
        %1494 = vmatpush1.bf16.msra.mxu0 %v1456
        %1495 = vmatprep.subr.bf16.mxu0 %v1454
        %1496 = vmatpush1.bf16.msra.mxu0 %v1453
        %1497 = vmatprep.subr.bf16.mxu0 %v1451
        %1498 = vmatpush1.bf16.msra.mxu0 %v1450
        %1499 = vmatprep.subr.bf16.mxu0 %v1448
        %1500 = vmatpush1.bf16.msra.mxu0 %v1447
        %1501 = vmatprep.subr.bf16.mxu0 %v1445
        %1502 = vmatpush1.bf16.msra.mxu0 %v1444
        %1503 = vmatprep.subr.bf16.mxu0 %v1442
        %1504 = vmatpush1.bf16.msra.mxu0 %v1441
        %1505 = vmatprep.subr.bf16.mxu0 0
        %1506 = vmatpush2.bf16.msra.mxu0 0
        %1507 = vmatprep.subr.bf16.mxu0 0
        %1508 = vmatpush2.bf16.msra.mxu0 0
        %1509 = vmatprep.subr.bf16.mxu0 0
        %1510 = vmatpush2.bf16.msra.mxu0 0
        %1511 = vmatprep.subr.bf16.mxu0 0
        %1512 = vmatpush2.bf16.msra.mxu0 0
        %1513 = vmatprep.subr.bf16.mxu0 0
        %1514 = vmatpush2.bf16.msra.mxu0 0
        %1515 = vmatprep.subr.bf16.mxu0 0
        %1516 = vmatpush2.bf16.msra.mxu0 0
        %1517 = vmatprep.subr.bf16.mxu0 0
        %1518 = vmatpush2.bf16.msra.mxu0 0
        %1519 = vmatprep.subr.bf16.mxu0 0
        %1520 = vmatpush2.bf16.msra.mxu0 0
        %1521 = vmatprep.mubr.bf16.mxu0 0
        %1522 = vmatmul.mubr.bf16.gmra.mxu0 %v1309
        %v1523 = vpop.f32.mrf.mxu0
        %v1524 = vadd.f32 %v1349, %v1523
        %v1525 = vpop.f32.mrf.mxu0
        %v1526 = vadd.f32 %v1353, %v1525
        %v1527 = vpop.f32.mrf.mxu0
        %v1528 = vpop.f32.mrf.mxu0
        %1529 = vdwg.mxu0
        %1530 = vmatprep.subr.bf16.mxu0 0
        %1531 = vmatpush1.bf16.msra.mxu0 %v1464
        %1532 = vmatprep.subr.bf16.mxu0 0
        %1533 = vmatpush1.bf16.msra.mxu0 %v1461
        %1534 = vmatprep.subr.bf16.mxu0 0
        %1535 = vmatpush1.bf16.msra.mxu0 %v1458
        %1536 = vmatprep.subr.bf16.mxu0 0
        %1537 = vmatpush1.bf16.msra.mxu0 %v1455
        %1538 = vmatprep.subr.bf16.mxu0 0
        %1539 = vmatpush1.bf16.msra.mxu0 %v1452
        %1540 = vmatprep.subr.bf16.mxu0 0
        %1541 = vmatpush1.bf16.msra.mxu0 %v1449
        %1542 = vmatprep.subr.bf16.mxu0 0
        %1543 = vmatpush1.bf16.msra.mxu0 %v1446
        %1544 = vmatprep.subr.bf16.mxu0 0
        %1545 = vmatpush1.bf16.msra.mxu0 %v1443
        %1546 = vmatprep.subr.bf16.mxu0 0
        %1547 = vmatpush2.bf16.msra.mxu0 0
        %1548 = vmatprep.subr.bf16.mxu0 0
        %1549 = vmatpush2.bf16.msra.mxu0 0
        %1550 = vmatprep.subr.bf16.mxu0 0
        %1551 = vmatpush2.bf16.msra.mxu0 0
        %1552 = vmatprep.subr.bf16.mxu0 0
        %1553 = vmatpush2.bf16.msra.mxu0 0
        %1554 = vmatprep.subr.bf16.mxu0 0
        %1555 = vmatpush2.bf16.msra.mxu0 0
        %1556 = vmatprep.subr.bf16.mxu0 0
        %1557 = vmatpush2.bf16.msra.mxu0 0
        %1558 = vmatprep.subr.bf16.mxu0 0
        %1559 = vmatpush2.bf16.msra.mxu0 0
        %1560 = vmatprep.subr.bf16.mxu0 0
        %1561 = vmatpush2.bf16.msra.mxu0 0
        %1562 = vmatprep.mubr.bf16.mxu0 0
        %1563 = vmatmul.mubr.bf16.gmra.mxu0 %v1309
        %v1564 = vpop.f32.mrf.mxu0
        %v1565 = vadd.f32 %v1357, %v1564
        %v1566 = vpop.f32.mrf.mxu0
        %v1567 = vpop.f32.mrf.mxu0
        %v1568 = vpop.f32.mrf.mxu0
        %1569 = vdwg.mxu0
        %v1570 = vadd.f32 %v1263, %v1524
        %v1571 = vxor.u32 %v1570, 2147483648
        %v1572 = vmul.f32 %v1571, 1.442695
        %v1573 = vpow.pop %v1572
        %v1574 = vadd.f32 %v1573, 1.0
        %v1575 = vrcp.pop %v1574
        %v1576 = vmul.f32 1.0, %v1575
        %v1577 = vadd.f32 %v1265, %v1526
        %v1578 = vxor.u32 %v1577, 2147483648
        %v1579 = vmul.f32 %v1578, 1.442695
        %v1580 = vpow.pop %v1579
        %v1581 = vadd.f32 %v1580, 1.0
        %v1582 = vrcp.pop %v1581
        %v1583 = vmul.f32 1.0, %v1582
        %v1584 = vmul.f32 %v1576, %v1565
        %v1585 = vadd.f32 %v1304, %v1584
        %v1586 = vtanh.pop %v1585
        %v1587 = vsub.f32 1.0, %v1583
        %v1588 = vmul.f32 %v1587, %v1586
        %v1589 = vmul.f32 %v1583, %v1048
        %v1590 = vadd.f32 %v1588, %v1589
        %1591 = vst [vmem:[%s1047] sm:$0xff] %v1590
        // Predicated region
        $region89: #{_fused_gru_decoder.1} parent=59 // pred_check
          %p1592 = pneg %p497
        $region90: #{_fused_gru_decoder.1} parent=59 // pred_check_branch
          %1594 = sbr.rel (%p1592) target = $region92
        $region91: #{_fused_gru_decoder.1} parent=59 // pred_region
          %v1595 = vld [vmem:[#allocation2] sm:$0xff]
          %1596 = vst [vmem:[#allocation15] sm:$0xff] %v1595
        $region92: #{_fused_gru_decoder.1} parent=59 // pred_fallthru
          _
        %p1597 = scmp.eq.s32.totalorder %s38, 3
        // Predicated region
        $region93: #{_fused_gru_decoder.1} parent=59 // pred_check
          %p1598 = pneg %p1597
        $region94: #{_fused_gru_decoder.1} parent=59 // pred_check_branch
          %1600 = sbr.rel (%p1598) target = $region96
        $region95: #{_fused_gru_decoder.1} parent=59 // pred_region
          %v1601 = vld [vmem:[%s1047] sm:$0xff]
          %v1602 = vpack.c.bf16 %v1601, %v1601
          %v1603 = vld [vmem:[#allocation13] sm:$0xf]
          %v1604 = vld [vmem:[#allocation13 + $0x4] sm:$0xf]
          %v1605 = vld [vmem:[#allocation13 + $0x8] sm:$0xf]
          %v1606 = vld [vmem:[#allocation13 + $0xc] sm:$0xf]
          %v1607 = vld [vmem:[#allocation13 + $0x10] sm:$0xf]
          %v1608 = vld [vmem:[#allocation13 + $0x14] sm:$0xf]
          %v1609 = vld [vmem:[#allocation13 + $0x18] sm:$0xf]
          %v1610 = vld [vmem:[#allocation13 + $0x1c] sm:$0xf]
          %v1611 = vld [vmem:[#allocation13 + $0x20] sm:$0xf]
          %v1612 = vld [vmem:[#allocation13 + $0x24] sm:$0xf]
          %v1613 = vld [vmem:[#allocation13 + $0x28] sm:$0xf]
          %v1614 = vld [vmem:[#allocation13 + $0x2c] sm:$0xf]
          %v1615 = vld [vmem:[#allocation13 + $0x30] sm:$0xf]
          %v1616 = vld [vmem:[#allocation13 + $0x34] sm:$0xf]
          %v1617 = vld [vmem:[#allocation13 + $0x38] sm:$0xf]
          %v1618 = vld [vmem:[#allocation13 + $0x3c] sm:$0xf]
          %v1619 = vld [vmem:[%s7] sm:$0x1]
          %v1621 = vlaneseq
          %v1622 = vshrl.u32 %v1621, 7
          %v1623 = vsub.s32 0, %v1622
          %v1624 = vrot.slane %v1619, %v1623
          %v1642 = vunpack.c.l.b16 %v1603
          %v1643 = vunpack.c.l.b16 %v1604
          %v1644 = vunpack.c.l.b16 %v1605
          %v1645 = vunpack.c.l.b16 %v1606
          %v1646 = vunpack.c.l.b16 %v1607
          %v1647 = vunpack.c.l.b16 %v1608
          %v1648 = vunpack.c.l.b16 %v1609
          %v1649 = vunpack.c.l.b16 %v1610
          %v1650 = vunpack.c.l.b16 %v1611
          %v1651 = vunpack.c.l.b16 %v1612
          %v1652 = vunpack.c.l.b16 %v1613
          %v1653 = vunpack.c.l.b16 %v1614
          %v1654 = vunpack.c.l.b16 %v1615
          %v1655 = vunpack.c.l.b16 %v1616
          %v1656 = vunpack.c.l.b16 %v1617
          %v1657 = vunpack.c.l.b16 %v1618
          %v1658 = vpack.c.b16 %v1643, %v1642
          %v1659 = vpack.c.b16 %v1645, %v1644
          %v1660 = vpack.c.b16 %v1647, %v1646
          %v1661 = vpack.c.b16 %v1649, %v1648
          %v1662 = vpack.c.b16 %v1651, %v1650
          %v1663 = vpack.c.b16 %v1653, %v1652
          %v1664 = vpack.c.b16 %v1655, %v1654
          %v1665 = vpack.c.b16 %v1657, %v1656
          %1674 = vmatprep.subr.bf16.mxu0 0
          %1675 = vmatpush1.bf16.msra.mxu0 %v1665
          %1676 = vmatprep.subr.bf16.mxu0 0
          %1677 = vmatpush1.bf16.msra.mxu0 %v1664
          %1678 = vmatprep.subr.bf16.mxu0 0
          %1679 = vmatpush1.bf16.msra.mxu0 %v1663
          %1680 = vmatprep.subr.bf16.mxu0 0
          %1681 = vmatpush1.bf16.msra.mxu0 %v1662
          %1682 = vmatprep.subr.bf16.mxu0 0
          %1683 = vmatpush1.bf16.msra.mxu0 %v1661
          %1684 = vmatprep.subr.bf16.mxu0 0
          %1685 = vmatpush1.bf16.msra.mxu0 %v1660
          %1686 = vmatprep.subr.bf16.mxu0 0
          %1687 = vmatpush1.bf16.msra.mxu0 %v1659
          %1688 = vmatprep.subr.bf16.mxu0 0
          %1689 = vmatpush1.bf16.msra.mxu0 %v1658
          %1690 = vmatprep.subr.bf16.mxu0 0
          %1691 = vmatpush2.bf16.msra.mxu0 0
          %1692 = vmatprep.subr.bf16.mxu0 0
          %1693 = vmatpush2.bf16.msra.mxu0 0
          %1694 = vmatprep.subr.bf16.mxu0 0
          %1695 = vmatpush2.bf16.msra.mxu0 0
          %1696 = vmatprep.subr.bf16.mxu0 0
          %1697 = vmatpush2.bf16.msra.mxu0 0
          %1698 = vmatprep.subr.bf16.mxu0 0
          %1699 = vmatpush2.bf16.msra.mxu0 0
          %1700 = vmatprep.subr.bf16.mxu0 0
          %1701 = vmatpush2.bf16.msra.mxu0 0
          %1702 = vmatprep.subr.bf16.mxu0 0
          %1703 = vmatpush2.bf16.msra.mxu0 0
          %1704 = vmatprep.subr.bf16.mxu0 0
          %1705 = vmatpush2.bf16.msra.mxu0 0
          %1706 = vmatprep.mubr.bf16.mxu0 0
          %1707 = vmatmul.mubr.bf16.gmra.mxu0 %v1602
          %v1708 = vpop.f32.mrf.mxu0
          %v1709 = vadd.f32 %v1624, %v1708
          %v1710 = vpop.f32.mrf.mxu0
          %v1711 = vpop.f32.mrf.mxu0
          %v1712 = vpop.f32.mrf.mxu0
          %1713 = vdwg.mxu0
          %v1714 = vmax.f32 %v1709, 0.0
          %v1715 = vld [vmem:[%s8] sm:$0x1]
          %v1717 = vlaneseq
          %v1718 = vshrl.u32 %v1717, 7
          %v1719 = vsub.s32 0, %v1718
          %v1720 = vrot.slane %v1715, %v1719
          %v1722 = vmul.f32 %v1714, %v1720
          %1723 = vadd.xlane.f32.xlu0 %v1722
          %v1724 = vpop.xlane.xlu0 %1723
          %v1725 = vld [vmem:[#allocation3] sm:$0x1]
          %v1727 = vlaneseq
          %v1728 = vshrl.u32 %v1727, 7
          %v1729 = vsub.s32 0, %v1728
          %v1730 = vrot.slane %v1725, %v1729
          %v1732 = vadd.f32 %v1724, %v1730
          %1734 = vset.pattern.permute.xlu0 0
          %1735 = vperm.xlu0 %1734, %v1732
          %v1736 = vpop.permute.xlu0 %1735
          %1738 = vst [vmem:[#allocation16] sm:$0xff] %v1736
        $region96: #{_fused_gru_decoder.1} parent=59 // pred_fallthru
          _
        // Predicated region
        $region97: #{_fused_gru_decoder.1} parent=59 // pred_check
          %p1739 = pneg %p285
        $region98: #{_fused_gru_decoder.1} parent=59 // pred_check_branch
          %1741 = sbr.rel (%p1739) target = $region100
        $region99: #{_fused_gru_decoder.1} parent=59 // pred_region
          %s1743 = ssub.s32 128, 128
          %1744 = vsyncadd [#allocation6], %s1743
          %s1745 = smul.addr %s37, 128
          %s1746 = scalar_lea.hbm %s10, %s1745
          %s1748 = sshll.u32 [#allocation15], 4
          %s1749 = int_to_ptr.vmem [resolvable:$true] %s1748
          %1751 = dma.vmem_to_hbm [thread:$0]  %s1749, 128, %s1746, [#allocation6]
        $region100: #{_fused_gru_decoder.1} parent=59 // pred_fallthru
          _
        // Predicated region
        $region101: #{_fused_gru_decoder.1} parent=59 // pred_check
          %p1752 = pneg %p311
        $region102: #{_fused_gru_decoder.1} parent=59 // pred_check_branch
          %1754 = sbr.rel (%p1752) target = $region104
        $region103: #{_fused_gru_decoder.1} parent=59 // pred_region
          %s1756 = ssub.s32 128, 128
          %1757 = vsyncadd [#allocation17], %s1756
          %s1758 = smul.addr %s37, 128
          %s1759 = scalar_lea.hbm %s11, %s1758
          %s1761 = sshll.u32 [#allocation16], 4
          %s1762 = int_to_ptr.vmem [resolvable:$true] %s1761
          %1764 = dma.vmem_to_hbm [thread:$0]  %s1762, 128, %s1759, [#allocation17]
        $region104: #{_fused_gru_decoder.1} parent=59 // pred_fallthru
          _
        // Predicated region
        $region105: #{_fused_gru_decoder.1} parent=59 // pred_check
          %p1765 = pneg %p285
        $region106: #{_fused_gru_decoder.1} parent=59 // pred_check_branch
          %1767 = sbr.rel (%p1765) target = $region108
        $region107: #{_fused_gru_decoder.1} parent=59 // pred_region
          %1768 = dma.done [#allocation6], 128
        $region108: #{_fused_gru_decoder.1} parent=59 // pred_fallthru
          _
        // Predicated region
        $region109: #{_fused_gru_decoder.1} parent=59 // pred_check
          %p1769 = pneg %p311
        $region110: #{_fused_gru_decoder.1} parent=59 // pred_check_branch
          %1771 = sbr.rel (%p1769) target = $region112
        $region111: #{_fused_gru_decoder.1} parent=59 // pred_region
          %1772 = dma.done [#allocation17], 128
        $region112: #{_fused_gru_decoder.1} parent=59 // pred_fallthru
          _
      $region60: #{_fused_gru_decoder.1} parent=5 // pred_fallthru
        _
      %p1773 = scmp.le.s32.totalorder 2, %s28
      // Predicated region
      $region113: #{_fused_gru_decoder.1} parent=5 // pred_check
        %p1774 = pneg %p1773
      $region114: #{_fused_gru_decoder.1} parent=5 // pred_check_branch
        %1776 = sbr.rel (%p1774) target = $region116
      $region115: #{_fused_gru_decoder.1} parent=5 // pred_region
        %s1777 = ssub.s32 %s28, 2
      $region116: #{_fused_gru_decoder.1} parent=5 // pred_fallthru
        _
    $region6: #{_fused_gru_decoder.1} parent=1 // loop_footer
      %s32 = sadd.s32 1, %s28
    $region7: #{_fused_gru_decoder.1} parent=1 // loop_footer_branch
      %27 = sbr.rel target = $region3
    $region8: #{_fused_gru_decoder.1} parent=1 // loop_exit
      _
    %1778 = vsyncpa [#allocation5], 1
    %s1779 = scalar_lea.sflag [#allocation5], 1
    %1780 = vsyncpa %s1779, 1
    %1781 = vsyncpa [#allocation8], 1
    %1782 = vsyncpa [#allocation11], 1
    %1783 = vsyncpa [#allocation14], 1
    %1784 = vsyncpa [#allocation6], 1
    %s1785 = scalar_lea.sflag [#allocation6], 1
    %1786 = vsyncpa %s1785, 1
    %1787 = vsyncpa [#allocation17], 1

</llo_original>
